<compile_context>
chip_gen: v6e
topology: v6e:2x2x1
jax: 0.10.0
libtpu: 0.0.40
codegen_flags: <defaults>
</compile_context>

<pallas_src>
import functools

import jax
import jax.numpy as jnp
from jax.experimental import pallas as pl
from jax.experimental.pallas import tpu as pltpu


# -----------------------------------------------------------------------------
# Pallas kernel: wavefront-interleaved stacked LSTM + fused lane-dense head.
# -----------------------------------------------------------------------------
def _recnn_regr_kernel(*refs, n_layers, hidden_dim, seq_len, batch):
    x_ref, h0_ref, c0_ref = refs[0], refs[1], refs[2]
    idx = 3
    w_ih0_ref, w_hh0_ref, b0_ref = refs[idx], refs[idx + 1], refs[idx + 2]
    idx += 3
    upper_refs = []                                   # (w_cat, bias) per layer > 0
    for _ in range(n_layers - 1):
        upper_refs.append((refs[idx], refs[idx + 1]))
        idx += 2
    w_head_ref, b_head_ref = refs[idx], refs[idx + 1]
    out_ref = refs[-1]

    B, T, H, L = batch, seq_len, hidden_dim, n_layers

    # Hoisted layer-0 input projection: one MXU push, bias folded once.
    # Rows are time-major (row t*B + b == x[b, t, :]), so per-step slices are
    # aligned full (B=8, 4H) tiles.
    x_proj0 = (jnp.dot(x_ref[...], w_ih0_ref[...],
                       preferred_element_type=jnp.float32) + b0_ref[...])
    w_hh0 = w_hh0_ref[...]

    # Hoist the upper-layer fused weights/biases out of the time loop.
    upper = [(w[...], b[...]) for (w, b) in upper_refs]

    def cell(gates, c_prev):
        # One full-width sigmoid over all 4H gate lanes; g-gate columns of the
        # weights were pre-scaled by 2 so tanh(z) == 2*sigmoid(2z) - 1.
        sig = jax.nn.sigmoid(gates)
        i_g = sig[:, 0 * H:1 * H]
        f_g = sig[:, 1 * H:2 * H]
        g_g = 2.0 * sig[:, 2 * H:3 * H] - 1.0
        o_g = sig[:, 3 * H:4 * H]
        c_new = f_g * c_prev + i_g * g_g
        h_new = o_g * jnp.tanh(c_new)
        return h_new, c_new

    h = [h0_ref[l] for l in range(L)]                 # (B, H) each
    c = [c0_ref[l] for l in range(L)]
    below = [None] * L      # below[l]: output of layer l-1 at the step layer l consumes next
    last_top = None

    # Wavefront: at global step s, layer l computes its time step t = s - l.
    # All per-layer updates within one step are mutually independent, so the
    # two recurrence chains co-issue in the VLIW bundles.
    for s in range(T + L - 1):
        new_below = list(below)
        for l in range(L):
            t = s - l
            if not (0 <= t < T):
                continue
            if l == 0:
                gates = (jnp.dot(h[0], w_hh0, preferred_element_type=jnp.float32)
                         + x_proj0[t * B:(t + 1) * B, :])
            else:
                w_cat, b_l = upper[l - 1]
                inp = jnp.concatenate([below[l], h[l]], axis=1)   # (B, 2H)
                gates = (jnp.dot(inp, w_cat, preferred_element_type=jnp.float32)
                         + b_l)
            h[l], c[l] = cell(gates, c[l])
            if l + 1 < L:
                new_below[l + 1] = h[l]
            elif t == T - 1:
                last_top = h[l]                        # top layer, last time step
        below = new_below

    # Fused lane-dense head: column 0 = phase, column 1 = dm, rest zero-padded.
    out_ref[...] = (jnp.dot(last_top, w_head_ref[...],
                            preferred_element_type=jnp.float32)
                    + b_head_ref[...])


def recnn_regr_forward(x, h0, c0, layer_params, wp, bp, wdm, bdm):
    B, T, F = x.shape
    L = len(layer_params)
    H = h0.shape[-1]

    # Pad batch up to the f32 sublane tile (8 rows) so every gate tile and
    # every x_proj slice is a full aligned (8, 128) vreg.
    Bp = max(8, ((B + 7) // 8) * 8)
    pad = Bp - B
    x_p = jnp.pad(x, ((0, pad), (0, 0), (0, 0)))
    h0_p = jnp.pad(h0, ((0, 0), (0, pad), (0, 0)))
    c0_p = jnp.pad(c0, ((0, 0), (0, pad), (0, 0)))

    # Time-major flatten so per-step rows are contiguous and sublane-aligned.
    x_flat = jnp.transpose(x_p, (1, 0, 2)).reshape(T * Bp, F)

    # Pre-scale the g-gate columns by 2: tanh(z) = 2*sigmoid(2z) - 1.
    def scale_g(w):
        return jnp.concatenate(
            [w[..., :2 * H], 2.0 * w[..., 2 * H:3 * H], w[..., 3 * H:]], axis=-1)

    prepped = []
    for l, (w_ih_t, w_hh_t, bias) in enumerate(layer_params):
        w_ih_s, w_hh_s, b_s = scale_g(w_ih_t), scale_g(w_hh_t), scale_g(bias)
        if l == 0:
            prepped += [w_ih_s, w_hh_s, b_s]
        else:
            # Fuse input + recurrent matmuls: one (2H, 4H) weight per step.
            prepped += [jnp.concatenate([w_ih_s, w_hh_s], axis=0), b_s]

    # Fused, lane-dense head: pad both (H, 1) heads into one (H, 128) weight.
    w_head = (jnp.zeros((H, 128), jnp.float32)
              .at[:, 0:1].set(wp).at[:, 1:2].set(wdm))
    b_head = (jnp.zeros((1, 128), jnp.float32)
              .at[:, 0:1].set(bp).at[:, 1:2].set(bdm))

    args = [x_flat, h0_p, c0_p] + prepped + [w_head, b_head]
    vmem_spec = pl.BlockSpec(memory_space=pltpu.MemorySpace.VMEM)

    kernel = functools.partial(_recnn_regr_kernel, n_layers=L, hidden_dim=H,
                               seq_len=T, batch=Bp)

    out = pl.pallas_call(
        kernel,
        out_shape=jax.ShapeDtypeStruct((Bp, 128), jnp.float32),
        in_specs=[vmem_spec] * len(args),
        out_specs=vmem_spec,
    )(*args)
    return out[:B, 0:1], out[:B, 1:2]                 # (phase, dm)


# -----------------------------------------------------------------------------
# Pure-JAX reference (same math, original unscaled weights) for correctness.
# -----------------------------------------------------------------------------
def recnn_regr_reference(x, h0, c0, layer_params, wp, bp, wdm, bdm):
    B, T, _ = x.shape
    H = h0.shape[-1]
    steps = [x[:, t, :] for t in range(T)]
    for l, (w_ih_t, w_hh_t, bias) in enumerate(layer_params):
        h, c = h0[l], c0[l]
        outs = []
        for t in range(T):
            gates = steps[t] @ w_ih_t + h @ w_hh_t + bias
            i_g = jax.nn.sigmoid(gates[:, 0 * H:1 * H])
            f_g = jax.nn.sigmoid(gates[:, 1 * H:2 * H])
            g_g = jnp.tanh(gates[:, 2 * H:3 * H])
            o_g = jax.nn.sigmoid(gates[:, 3 * H:4 * H])
            c = f_g * c + i_g * g_g
            h = o_g * jnp.tanh(c)
            outs.append(h)
        steps = outs
    last = steps[-1]
    return last @ wp + bp, last @ wdm + bdm


# -----------------------------------------------------------------------------
# Deterministic parameter construction (mirrors RecNN_Regr.__init__/init_weights)
# -----------------------------------------------------------------------------
def make_params(key, n_feats, hidden_dim, n_layers):
    def xavier_normal(k, shape):
        fan_out, fan_in = shape
        std = (2.0 / (fan_in + fan_out)) ** 0.5
        return std * jax.random.normal(k, shape, dtype=jnp.float32)

    layer_params = []
    for l in range(n_layers):
        in_dim = n_feats if l == 0 else hidden_dim
        key, k1, k2 = jax.random.split(key, 3)
        w_ih = xavier_normal(k1, (4 * hidden_dim, in_dim))     # PyTorch shape
        w_hh = xavier_normal(k2, (4 * hidden_dim, hidden_dim))
        # LSTM biases init to constant 1 (b_ih + b_hh -> 2), pre-summed.
        bias = jnp.full((1, 4 * hidden_dim), 2.0, dtype=jnp.float32)
        layer_params.append((w_ih.T, w_hh.T, bias))            # pre-transposed

    key, k1, k2, k3, k4 = jax.random.split(key, 5)
    bound = 1.0 / (hidden_dim ** 0.5)
    wp = jax.random.uniform(k1, (hidden_dim, 1), jnp.float32, -bound, bound)
    bp = jax.random.uniform(k2, (1, 1), jnp.float32, -bound, bound)
    wdm = jax.random.uniform(k3, (hidden_dim, 1), jnp.float32, -bound, bound)
    bdm = jax.random.uniform(k4, (1, 1), jnp.float32, -bound, bound)
    return layer_params, wp, bp, wdm, bdm


if __name__ == "__main__":
    # Small shapes consistent with the module: x is (batch, seq_len, n_feats).
    batch, seq_len, n_feats, hidden_dim, n_layers = 4, 8, 16, 32, 2

    root = jax.random.PRNGKey(0)
    k_x, k_h0, k_c0, k_params = jax.random.split(root, 4)

    x = jax.random.normal(k_x, (batch, seq_len, n_feats), dtype=jnp.float32)
    # forward() draws random initial states (torch.randn) -- deterministic here.
    h0 = jax.random.normal(k_h0, (n_layers, batch, hidden_dim), dtype=jnp.float32)
    c0 = jax.random.normal(k_c0, (n_layers, batch, hidden_dim), dtype=jnp.float32)

    layer_params, wp, bp, wdm, bdm = make_params(k_params, n_feats, hidden_dim, n_layers)

    phase, dm = recnn_regr_forward(x, h0, c0, layer_params, wp, bp, wdm, bdm)
    jax.block_until_ready((phase, dm))

    phase_ref, dm_ref = recnn_regr_reference(x, h0, c0, layer_params, wp, bp, wdm, bdm)
    assert phase.shape == (batch, 1) and dm.shape == (batch, 1)
    assert jnp.allclose(phase, phase_ref, rtol=1e-4, atol=1e-4)
    assert jnp.allclose(dm, dm_ref, rtol=1e-4, atol=1e-4)

    print("KERNEL_OK")
</pallas_src>

<mosaic_0001>
module attributes {stable_mosaic.version = 11 : i64} {
  func.func @_recnn_regr_kernel(%arg0: memref<64x16xf32, #tpu.memory_space<vmem>>, %arg1: memref<2x8x32xf32, #tpu.memory_space<vmem>>, %arg2: memref<2x8x32xf32, #tpu.memory_space<vmem>>, %arg3: memref<16x128xf32, #tpu.memory_space<vmem>>, %arg4: memref<32x128xf32, #tpu.memory_space<vmem>>, %arg5: memref<1x128xf32, #tpu.memory_space<vmem>>, %arg6: memref<64x128xf32, #tpu.memory_space<vmem>>, %arg7: memref<1x128xf32, #tpu.memory_space<vmem>>, %arg8: memref<32x128xf32, #tpu.memory_space<vmem>>, %arg9: memref<1x128xf32, #tpu.memory_space<vmem>>, %arg10: memref<8x128xf32, #tpu.memory_space<vmem>>) attributes {dimension_semantics = [], scalar_prefetch = 0 : i64, scratch_operands = 0 : i64, tpu.core_type = #tpu.core_type<tc>} {
    %c0 = arith.constant 0 : index
    %c0_0 = arith.constant 0 : index
    %0 = vector.load %arg0[%c0, %c0_0] : memref<64x16xf32, #tpu.memory_space<vmem>>, vector<64x16xf32>
    %c0_1 = arith.constant 0 : index
    %c0_2 = arith.constant 0 : index
    %1 = vector.load %arg3[%c0_1, %c0_2] : memref<16x128xf32, #tpu.memory_space<vmem>>, vector<16x128xf32>
    %cst = arith.constant dense<0.000000e+00> : vector<64x128xf32>
    %2 = tpu.matmul %0, %1, %cst {dimension_numbers = #tpu.dot_dimension_numbers<[1], [0], [0], [1], [0, 0, 1, 1], [], []>} : vector<64x16xf32>, vector<16x128xf32>, vector<64x128xf32> -> vector<64x128xf32>
    %c0_3 = arith.constant 0 : index
    %c0_4 = arith.constant 0 : index
    %3 = vector.load %arg5[%c0_3, %c0_4] : memref<1x128xf32, #tpu.memory_space<vmem>>, vector<1x128xf32>
    %4 = vector.broadcast %3 : vector<1x128xf32> to vector<64x128xf32>
    %5 = arith.addf %2, %4 : vector<64x128xf32>
    %c0_5 = arith.constant 0 : index
    %c0_6 = arith.constant 0 : index
    %6 = vector.load %arg4[%c0_5, %c0_6] : memref<32x128xf32, #tpu.memory_space<vmem>>, vector<32x128xf32>
    %c0_7 = arith.constant 0 : index
    %c0_8 = arith.constant 0 : index
    %7 = vector.load %arg6[%c0_7, %c0_8] : memref<64x128xf32, #tpu.memory_space<vmem>>, vector<64x128xf32>
    %c0_9 = arith.constant 0 : index
    %c0_10 = arith.constant 0 : index
    %8 = vector.load %arg7[%c0_9, %c0_10] : memref<1x128xf32, #tpu.memory_space<vmem>>, vector<1x128xf32>
    %c0_11 = arith.constant 0 : index
    %c0_12 = arith.constant 0 : index
    %c0_13 = arith.constant 0 : index
    %9 = vector.load %arg1[%c0_11, %c0_12, %c0_13] : memref<2x8x32xf32, #tpu.memory_space<vmem>>, vector<1x8x32xf32>
    %10 = vector.shape_cast %9 : vector<1x8x32xf32> to vector<8x32xf32>
    %c1 = arith.constant 1 : index
    %c0_14 = arith.constant 0 : index
    %c0_15 = arith.constant 0 : index
    %11 = vector.load %arg1[%c1, %c0_14, %c0_15] : memref<2x8x32xf32, #tpu.memory_space<vmem>>, vector<1x8x32xf32>
    %12 = vector.shape_cast %11 : vector<1x8x32xf32> to vector<8x32xf32>
    %c0_16 = arith.constant 0 : index
    %c0_17 = arith.constant 0 : index
    %c0_18 = arith.constant 0 : index
    %13 = vector.load %arg2[%c0_16, %c0_17, %c0_18] : memref<2x8x32xf32, #tpu.memory_space<vmem>>, vector<1x8x32xf32>
    %14 = vector.shape_cast %13 : vector<1x8x32xf32> to vector<8x32xf32>
    %c1_19 = arith.constant 1 : index
    %c0_20 = arith.constant 0 : index
    %c0_21 = arith.constant 0 : index
    %15 = vector.load %arg2[%c1_19, %c0_20, %c0_21] : memref<2x8x32xf32, #tpu.memory_space<vmem>>, vector<1x8x32xf32>
    %16 = vector.shape_cast %15 : vector<1x8x32xf32> to vector<8x32xf32>
    %cst_22 = arith.constant dense<0.000000e+00> : vector<8x128xf32>
    %17 = tpu.matmul %10, %6, %cst_22 {dimension_numbers = #tpu.dot_dimension_numbers<[1], [0], [0], [1], [0, 0, 1, 1], [], []>} : vector<8x32xf32>, vector<32x128xf32>, vector<8x128xf32> -> vector<8x128xf32>
    %18 = vector.extract_strided_slice %5 {offsets = [0, 0], sizes = [8, 128], strides = [1, 1]} : vector<64x128xf32> to vector<8x128xf32>
    %19 = arith.addf %17, %18 : vector<8x128xf32>
    %20 = arith.negf %19 : vector<8x128xf32>
    %21 = math.exp %20 : vector<8x128xf32>
    %cst_23 = arith.constant 1.000000e+00 : f32
    %22 = vector.broadcast %cst_23 : f32 to vector<8x128xf32>
    %23 = arith.addf %22, %21 : vector<8x128xf32>
    %24 = arith.divf %22, %23 : vector<8x128xf32>
    %25 = vector.extract_strided_slice %24 {offsets = [0, 0], sizes = [8, 32], strides = [1, 1]} : vector<8x128xf32> to vector<8x32xf32>
    %26 = vector.extract_strided_slice %24 {offsets = [0, 32], sizes = [8, 32], strides = [1, 1]} : vector<8x128xf32> to vector<8x32xf32>
    %27 = vector.extract_strided_slice %24 {offsets = [0, 64], sizes = [8, 32], strides = [1, 1]} : vector<8x128xf32> to vector<8x32xf32>
    %cst_24 = arith.constant 2.000000e+00 : f32
    %28 = vector.broadcast %cst_24 : f32 to vector<8x32xf32>
    %29 = arith.mulf %28, %27 : vector<8x32xf32>
    %cst_25 = arith.constant 1.000000e+00 : f32
    %30 = vector.broadcast %cst_25 : f32 to vector<8x32xf32>
    %31 = arith.subf %29, %30 : vector<8x32xf32>
    %32 = vector.extract_strided_slice %24 {offsets = [0, 96], sizes = [8, 32], strides = [1, 1]} : vector<8x128xf32> to vector<8x32xf32>
    %33 = arith.mulf %26, %14 : vector<8x32xf32>
    %34 = arith.mulf %25, %31 : vector<8x32xf32>
    %35 = arith.addf %33, %34 : vector<8x32xf32>
    %36 = math.tanh %35 : vector<8x32xf32>
    %37 = arith.mulf %32, %36 : vector<8x32xf32>
    %cst_26 = arith.constant dense<0.000000e+00> : vector<8x128xf32>
    %38 = tpu.matmul %37, %6, %cst_26 {dimension_numbers = #tpu.dot_dimension_numbers<[1], [0], [0], [1], [0, 0, 1, 1], [], []>} : vector<8x32xf32>, vector<32x128xf32>, vector<8x128xf32> -> vector<8x128xf32>
    %39 = vector.extract_strided_slice %5 {offsets = [8, 0], sizes = [8, 128], strides = [1, 1]} : vector<64x128xf32> to vector<8x128xf32>
    %40 = arith.addf %38, %39 : vector<8x128xf32>
    %41 = arith.negf %40 : vector<8x128xf32>
    %42 = math.exp %41 : vector<8x128xf32>
    %cst_27 = arith.constant 1.000000e+00 : f32
    %43 = vector.broadcast %cst_27 : f32 to vector<8x128xf32>
    %44 = arith.addf %43, %42 : vector<8x128xf32>
    %45 = arith.divf %43, %44 : vector<8x128xf32>
    %46 = vector.extract_strided_slice %45 {offsets = [0, 0], sizes = [8, 32], strides = [1, 1]} : vector<8x128xf32> to vector<8x32xf32>
    %47 = vector.extract_strided_slice %45 {offsets = [0, 32], sizes = [8, 32], strides = [1, 1]} : vector<8x128xf32> to vector<8x32xf32>
    %48 = vector.extract_strided_slice %45 {offsets = [0, 64], sizes = [8, 32], strides = [1, 1]} : vector<8x128xf32> to vector<8x32xf32>
    %cst_28 = arith.constant 2.000000e+00 : f32
    %49 = vector.broadcast %cst_28 : f32 to vector<8x32xf32>
    %50 = arith.mulf %49, %48 : vector<8x32xf32>
    %cst_29 = arith.constant 1.000000e+00 : f32
    %51 = vector.broadcast %cst_29 : f32 to vector<8x32xf32>
    %52 = arith.subf %50, %51 : vector<8x32xf32>
    %53 = vector.extract_strided_slice %45 {offsets = [0, 96], sizes = [8, 32], strides = [1, 1]} : vector<8x128xf32> to vector<8x32xf32>
    %54 = arith.mulf %47, %35 : vector<8x32xf32>
    %55 = arith.mulf %46, %52 : vector<8x32xf32>
    %56 = arith.addf %54, %55 : vector<8x32xf32>
    %57 = math.tanh %56 : vector<8x32xf32>
    %58 = arith.mulf %53, %57 : vector<8x32xf32>
    %59 = tpu.concatenate %37, %12 in 1 : vector<8x32xf32>, vector<8x32xf32> -> vector<8x64xf32>
    %cst_30 = arith.constant dense<0.000000e+00> : vector<8x128xf32>
    %60 = tpu.matmul %59, %7, %cst_30 {dimension_numbers = #tpu.dot_dimension_numbers<[1], [0], [0], [1], [0, 0, 1, 1], [], []>} : vector<8x64xf32>, vector<64x128xf32>, vector<8x128xf32> -> vector<8x128xf32>
    %61 = vector.broadcast %8 : vector<1x128xf32> to vector<8x128xf32>
    %62 = arith.addf %60, %61 : vector<8x128xf32>
    %63 = arith.negf %62 : vector<8x128xf32>
    %64 = math.exp %63 : vector<8x128xf32>
    %cst_31 = arith.constant 1.000000e+00 : f32
    %65 = vector.broadcast %cst_31 : f32 to vector<8x128xf32>
    %66 = arith.addf %65, %64 : vector<8x128xf32>
    %67 = arith.divf %65, %66 : vector<8x128xf32>
    %68 = vector.extract_strided_slice %67 {offsets = [0, 0], sizes = [8, 32], strides = [1, 1]} : vector<8x128xf32> to vector<8x32xf32>
    %69 = vector.extract_strided_slice %67 {offsets = [0, 32], sizes = [8, 32], strides = [1, 1]} : vector<8x128xf32> to vector<8x32xf32>
    %70 = vector.extract_strided_slice %67 {offsets = [0, 64], sizes = [8, 32], strides = [1, 1]} : vector<8x128xf32> to vector<8x32xf32>
    %cst_32 = arith.constant 2.000000e+00 : f32
    %71 = vector.broadcast %cst_32 : f32 to vector<8x32xf32>
    %72 = arith.mulf %71, %70 : vector<8x32xf32>
    %cst_33 = arith.constant 1.000000e+00 : f32
    %73 = vector.broadcast %cst_33 : f32 to vector<8x32xf32>
    %74 = arith.subf %72, %73 : vector<8x32xf32>
    %75 = vector.extract_strided_slice %67 {offsets = [0, 96], sizes = [8, 32], strides = [1, 1]} : vector<8x128xf32> to vector<8x32xf32>
    %76 = arith.mulf %69, %16 : vector<8x32xf32>
    %77 = arith.mulf %68, %74 : vector<8x32xf32>
    %78 = arith.addf %76, %77 : vector<8x32xf32>
    %79 = math.tanh %78 : vector<8x32xf32>
    %80 = arith.mulf %75, %79 : vector<8x32xf32>
    %cst_34 = arith.constant dense<0.000000e+00> : vector<8x128xf32>
    %81 = tpu.matmul %58, %6, %cst_34 {dimension_numbers = #tpu.dot_dimension_numbers<[1], [0], [0], [1], [0, 0, 1, 1], [], []>} : vector<8x32xf32>, vector<32x128xf32>, vector<8x128xf32> -> vector<8x128xf32>
    %82 = vector.extract_strided_slice %5 {offsets = [16, 0], sizes = [8, 128], strides = [1, 1]} : vector<64x128xf32> to vector<8x128xf32>
    %83 = arith.addf %81, %82 : vector<8x128xf32>
    %84 = arith.negf %83 : vector<8x128xf32>
    %85 = math.exp %84 : vector<8x128xf32>
    %cst_35 = arith.constant 1.000000e+00 : f32
    %86 = vector.broadcast %cst_35 : f32 to vector<8x128xf32>
    %87 = arith.addf %86, %85 : vector<8x128xf32>
    %88 = arith.divf %86, %87 : vector<8x128xf32>
    %89 = vector.extract_strided_slice %88 {offsets = [0, 0], sizes = [8, 32], strides = [1, 1]} : vector<8x128xf32> to vector<8x32xf32>
    %90 = vector.extract_strided_slice %88 {offsets = [0, 32], sizes = [8, 32], strides = [1, 1]} : vector<8x128xf32> to vector<8x32xf32>
    %91 = vector.extract_strided_slice %88 {offsets = [0, 64], sizes = [8, 32], strides = [1, 1]} : vector<8x128xf32> to vector<8x32xf32>
    %cst_36 = arith.constant 2.000000e+00 : f32
    %92 = vector.broadcast %cst_36 : f32 to vector<8x32xf32>
    %93 = arith.mulf %92, %91 : vector<8x32xf32>
    %cst_37 = arith.constant 1.000000e+00 : f32
    %94 = vector.broadcast %cst_37 : f32 to vector<8x32xf32>
    %95 = arith.subf %93, %94 : vector<8x32xf32>
    %96 = vector.extract_strided_slice %88 {offsets = [0, 96], sizes = [8, 32], strides = [1, 1]} : vector<8x128xf32> to vector<8x32xf32>
    %97 = arith.mulf %90, %56 : vector<8x32xf32>
    %98 = arith.mulf %89, %95 : vector<8x32xf32>
    %99 = arith.addf %97, %98 : vector<8x32xf32>
    %100 = math.tanh %99 : vector<8x32xf32>
    %101 = arith.mulf %96, %100 : vector<8x32xf32>
    %102 = tpu.concatenate %58, %80 in 1 : vector<8x32xf32>, vector<8x32xf32> -> vector<8x64xf32>
    %cst_38 = arith.constant dense<0.000000e+00> : vector<8x128xf32>
    %103 = tpu.matmul %102, %7, %cst_38 {dimension_numbers = #tpu.dot_dimension_numbers<[1], [0], [0], [1], [0, 0, 1, 1], [], []>} : vector<8x64xf32>, vector<64x128xf32>, vector<8x128xf32> -> vector<8x128xf32>
    %104 = vector.broadcast %8 : vector<1x128xf32> to vector<8x128xf32>
    %105 = arith.addf %103, %104 : vector<8x128xf32>
    %106 = arith.negf %105 : vector<8x128xf32>
    %107 = math.exp %106 : vector<8x128xf32>
    %cst_39 = arith.constant 1.000000e+00 : f32
    %108 = vector.broadcast %cst_39 : f32 to vector<8x128xf32>
    %109 = arith.addf %108, %107 : vector<8x128xf32>
    %110 = arith.divf %108, %109 : vector<8x128xf32>
    %111 = vector.extract_strided_slice %110 {offsets = [0, 0], sizes = [8, 32], strides = [1, 1]} : vector<8x128xf32> to vector<8x32xf32>
    %112 = vector.extract_strided_slice %110 {offsets = [0, 32], sizes = [8, 32], strides = [1, 1]} : vector<8x128xf32> to vector<8x32xf32>
    %113 = vector.extract_strided_slice %110 {offsets = [0, 64], sizes = [8, 32], strides = [1, 1]} : vector<8x128xf32> to vector<8x32xf32>
    %cst_40 = arith.constant 2.000000e+00 : f32
    %114 = vector.broadcast %cst_40 : f32 to vector<8x32xf32>
    %115 = arith.mulf %114, %113 : vector<8x32xf32>
    %cst_41 = arith.constant 1.000000e+00 : f32
    %116 = vector.broadcast %cst_41 : f32 to vector<8x32xf32>
    %117 = arith.subf %115, %116 : vector<8x32xf32>
    %118 = vector.extract_strided_slice %110 {offsets = [0, 96], sizes = [8, 32], strides = [1, 1]} : vector<8x128xf32> to vector<8x32xf32>
    %119 = arith.mulf %112, %78 : vector<8x32xf32>
    %120 = arith.mulf %111, %117 : vector<8x32xf32>
    %121 = arith.addf %119, %120 : vector<8x32xf32>
    %122 = math.tanh %121 : vector<8x32xf32>
    %123 = arith.mulf %118, %122 : vector<8x32xf32>
    %cst_42 = arith.constant dense<0.000000e+00> : vector<8x128xf32>
    %124 = tpu.matmul %101, %6, %cst_42 {dimension_numbers = #tpu.dot_dimension_numbers<[1], [0], [0], [1], [0, 0, 1, 1], [], []>} : vector<8x32xf32>, vector<32x128xf32>, vector<8x128xf32> -> vector<8x128xf32>
    %125 = vector.extract_strided_slice %5 {offsets = [24, 0], sizes = [8, 128], strides = [1, 1]} : vector<64x128xf32> to vector<8x128xf32>
    %126 = arith.addf %124, %125 : vector<8x128xf32>
    %127 = arith.negf %126 : vector<8x128xf32>
    %128 = math.exp %127 : vector<8x128xf32>
    %cst_43 = arith.constant 1.000000e+00 : f32
    %129 = vector.broadcast %cst_43 : f32 to vector<8x128xf32>
    %130 = arith.addf %129, %128 : vector<8x128xf32>
    %131 = arith.divf %129, %130 : vector<8x128xf32>
    %132 = vector.extract_strided_slice %131 {offsets = [0, 0], sizes = [8, 32], strides = [1, 1]} : vector<8x128xf32> to vector<8x32xf32>
    %133 = vector.extract_strided_slice %131 {offsets = [0, 32], sizes = [8, 32], strides = [1, 1]} : vector<8x128xf32> to vector<8x32xf32>
    %134 = vector.extract_strided_slice %131 {offsets = [0, 64], sizes = [8, 32], strides = [1, 1]} : vector<8x128xf32> to vector<8x32xf32>
    %cst_44 = arith.constant 2.000000e+00 : f32
    %135 = vector.broadcast %cst_44 : f32 to vector<8x32xf32>
    %136 = arith.mulf %135, %134 : vector<8x32xf32>
    %cst_45 = arith.constant 1.000000e+00 : f32
    %137 = vector.broadcast %cst_45 : f32 to vector<8x32xf32>
    %138 = arith.subf %136, %137 : vector<8x32xf32>
    %139 = vector.extract_strided_slice %131 {offsets = [0, 96], sizes = [8, 32], strides = [1, 1]} : vector<8x128xf32> to vector<8x32xf32>
    %140 = arith.mulf %133, %99 : vector<8x32xf32>
    %141 = arith.mulf %132, %138 : vector<8x32xf32>
    %142 = arith.addf %140, %141 : vector<8x32xf32>
    %143 = math.tanh %142 : vector<8x32xf32>
    %144 = arith.mulf %139, %143 : vector<8x32xf32>
    %145 = tpu.concatenate %101, %123 in 1 : vector<8x32xf32>, vector<8x32xf32> -> vector<8x64xf32>
    %cst_46 = arith.constant dense<0.000000e+00> : vector<8x128xf32>
    %146 = tpu.matmul %145, %7, %cst_46 {dimension_numbers = #tpu.dot_dimension_numbers<[1], [0], [0], [1], [0, 0, 1, 1], [], []>} : vector<8x64xf32>, vector<64x128xf32>, vector<8x128xf32> -> vector<8x128xf32>
    %147 = vector.broadcast %8 : vector<1x128xf32> to vector<8x128xf32>
    %148 = arith.addf %146, %147 : vector<8x128xf32>
    %149 = arith.negf %148 : vector<8x128xf32>
    %150 = math.exp %149 : vector<8x128xf32>
    %cst_47 = arith.constant 1.000000e+00 : f32
    %151 = vector.broadcast %cst_47 : f32 to vector<8x128xf32>
    %152 = arith.addf %151, %150 : vector<8x128xf32>
    %153 = arith.divf %151, %152 : vector<8x128xf32>
    %154 = vector.extract_strided_slice %153 {offsets = [0, 0], sizes = [8, 32], strides = [1, 1]} : vector<8x128xf32> to vector<8x32xf32>
    %155 = vector.extract_strided_slice %153 {offsets = [0, 32], sizes = [8, 32], strides = [1, 1]} : vector<8x128xf32> to vector<8x32xf32>
    %156 = vector.extract_strided_slice %153 {offsets = [0, 64], sizes = [8, 32], strides = [1, 1]} : vector<8x128xf32> to vector<8x32xf32>
    %cst_48 = arith.constant 2.000000e+00 : f32
    %157 = vector.broadcast %cst_48 : f32 to vector<8x32xf32>
    %158 = arith.mulf %157, %156 : vector<8x32xf32>
    %cst_49 = arith.constant 1.000000e+00 : f32
    %159 = vector.broadcast %cst_49 : f32 to vector<8x32xf32>
    %160 = arith.subf %158, %159 : vector<8x32xf32>
    %161 = vector.extract_strided_slice %153 {offsets = [0, 96], sizes = [8, 32], strides = [1, 1]} : vector<8x128xf32> to vector<8x32xf32>
    %162 = arith.mulf %155, %121 : vector<8x32xf32>
    %163 = arith.mulf %154, %160 : vector<8x32xf32>
    %164 = arith.addf %162, %163 : vector<8x32xf32>
    %165 = math.tanh %164 : vector<8x32xf32>
    %166 = arith.mulf %161, %165 : vector<8x32xf32>
    %cst_50 = arith.constant dense<0.000000e+00> : vector<8x128xf32>
    %167 = tpu.matmul %144, %6, %cst_50 {dimension_numbers = #tpu.dot_dimension_numbers<[1], [0], [0], [1], [0, 0, 1, 1], [], []>} : vector<8x32xf32>, vector<32x128xf32>, vector<8x128xf32> -> vector<8x128xf32>
    %168 = vector.extract_strided_slice %5 {offsets = [32, 0], sizes = [8, 128], strides = [1, 1]} : vector<64x128xf32> to vector<8x128xf32>
    %169 = arith.addf %167, %168 : vector<8x128xf32>
    %170 = arith.negf %169 : vector<8x128xf32>
    %171 = math.exp %170 : vector<8x128xf32>
    %cst_51 = arith.constant 1.000000e+00 : f32
    %172 = vector.broadcast %cst_51 : f32 to vector<8x128xf32>
    %173 = arith.addf %172, %171 : vector<8x128xf32>
    %174 = arith.divf %172, %173 : vector<8x128xf32>
    %175 = vector.extract_strided_slice %174 {offsets = [0, 0], sizes = [8, 32], strides = [1, 1]} : vector<8x128xf32> to vector<8x32xf32>
    %176 = vector.extract_strided_slice %174 {offsets = [0, 32], sizes = [8, 32], strides = [1, 1]} : vector<8x128xf32> to vector<8x32xf32>
    %177 = vector.extract_strided_slice %174 {offsets = [0, 64], sizes = [8, 32], strides = [1, 1]} : vector<8x128xf32> to vector<8x32xf32>
    %cst_52 = arith.constant 2.000000e+00 : f32
    %178 = vector.broadcast %cst_52 : f32 to vector<8x32xf32>
    %179 = arith.mulf %178, %177 : vector<8x32xf32>
    %cst_53 = arith.constant 1.000000e+00 : f32
    %180 = vector.broadcast %cst_53 : f32 to vector<8x32xf32>
    %181 = arith.subf %179, %180 : vector<8x32xf32>
    %182 = vector.extract_strided_slice %174 {offsets = [0, 96], sizes = [8, 32], strides = [1, 1]} : vector<8x128xf32> to vector<8x32xf32>
    %183 = arith.mulf %176, %142 : vector<8x32xf32>
    %184 = arith.mulf %175, %181 : vector<8x32xf32>
    %185 = arith.addf %183, %184 : vector<8x32xf32>
    %186 = math.tanh %185 : vector<8x32xf32>
    %187 = arith.mulf %182, %186 : vector<8x32xf32>
    %188 = tpu.concatenate %144, %166 in 1 : vector<8x32xf32>, vector<8x32xf32> -> vector<8x64xf32>
    %cst_54 = arith.constant dense<0.000000e+00> : vector<8x128xf32>
    %189 = tpu.matmul %188, %7, %cst_54 {dimension_numbers = #tpu.dot_dimension_numbers<[1], [0], [0], [1], [0, 0, 1, 1], [], []>} : vector<8x64xf32>, vector<64x128xf32>, vector<8x128xf32> -> vector<8x128xf32>
    %190 = vector.broadcast %8 : vector<1x128xf32> to vector<8x128xf32>
    %191 = arith.addf %189, %190 : vector<8x128xf32>
    %192 = arith.negf %191 : vector<8x128xf32>
    %193 = math.exp %192 : vector<8x128xf32>
    %cst_55 = arith.constant 1.000000e+00 : f32
    %194 = vector.broadcast %cst_55 : f32 to vector<8x128xf32>
    %195 = arith.addf %194, %193 : vector<8x128xf32>
    %196 = arith.divf %194, %195 : vector<8x128xf32>
    %197 = vector.extract_strided_slice %196 {offsets = [0, 0], sizes = [8, 32], strides = [1, 1]} : vector<8x128xf32> to vector<8x32xf32>
    %198 = vector.extract_strided_slice %196 {offsets = [0, 32], sizes = [8, 32], strides = [1, 1]} : vector<8x128xf32> to vector<8x32xf32>
    %199 = vector.extract_strided_slice %196 {offsets = [0, 64], sizes = [8, 32], strides = [1, 1]} : vector<8x128xf32> to vector<8x32xf32>
    %cst_56 = arith.constant 2.000000e+00 : f32
    %200 = vector.broadcast %cst_56 : f32 to vector<8x32xf32>
    %201 = arith.mulf %200, %199 : vector<8x32xf32>
    %cst_57 = arith.constant 1.000000e+00 : f32
    %202 = vector.broadcast %cst_57 : f32 to vector<8x32xf32>
    %203 = arith.subf %201, %202 : vector<8x32xf32>
    %204 = vector.extract_strided_slice %196 {offsets = [0, 96], sizes = [8, 32], strides = [1, 1]} : vector<8x128xf32> to vector<8x32xf32>
    %205 = arith.mulf %198, %164 : vector<8x32xf32>
    %206 = arith.mulf %197, %203 : vector<8x32xf32>
    %207 = arith.addf %205, %206 : vector<8x32xf32>
    %208 = math.tanh %207 : vector<8x32xf32>
    %209 = arith.mulf %204, %208 : vector<8x32xf32>
    %cst_58 = arith.constant dense<0.000000e+00> : vector<8x128xf32>
    %210 = tpu.matmul %187, %6, %cst_58 {dimension_numbers = #tpu.dot_dimension_numbers<[1], [0], [0], [1], [0, 0, 1, 1], [], []>} : vector<8x32xf32>, vector<32x128xf32>, vector<8x128xf32> -> vector<8x128xf32>
    %211 = vector.extract_strided_slice %5 {offsets = [40, 0], sizes = [8, 128], strides = [1, 1]} : vector<64x128xf32> to vector<8x128xf32>
    %212 = arith.addf %210, %211 : vector<8x128xf32>
    %213 = arith.negf %212 : vector<8x128xf32>
    %214 = math.exp %213 : vector<8x128xf32>
    %cst_59 = arith.constant 1.000000e+00 : f32
    %215 = vector.broadcast %cst_59 : f32 to vector<8x128xf32>
    %216 = arith.addf %215, %214 : vector<8x128xf32>
    %217 = arith.divf %215, %216 : vector<8x128xf32>
    %218 = vector.extract_strided_slice %217 {offsets = [0, 0], sizes = [8, 32], strides = [1, 1]} : vector<8x128xf32> to vector<8x32xf32>
    %219 = vector.extract_strided_slice %217 {offsets = [0, 32], sizes = [8, 32], strides = [1, 1]} : vector<8x128xf32> to vector<8x32xf32>
    %220 = vector.extract_strided_slice %217 {offsets = [0, 64], sizes = [8, 32], strides = [1, 1]} : vector<8x128xf32> to vector<8x32xf32>
    %cst_60 = arith.constant 2.000000e+00 : f32
    %221 = vector.broadcast %cst_60 : f32 to vector<8x32xf32>
    %222 = arith.mulf %221, %220 : vector<8x32xf32>
    %cst_61 = arith.constant 1.000000e+00 : f32
    %223 = vector.broadcast %cst_61 : f32 to vector<8x32xf32>
    %224 = arith.subf %222, %223 : vector<8x32xf32>
    %225 = vector.extract_strided_slice %217 {offsets = [0, 96], sizes = [8, 32], strides = [1, 1]} : vector<8x128xf32> to vector<8x32xf32>
    %226 = arith.mulf %219, %185 : vector<8x32xf32>
    %227 = arith.mulf %218, %224 : vector<8x32xf32>
    %228 = arith.addf %226, %227 : vector<8x32xf32>
    %229 = math.tanh %228 : vector<8x32xf32>
    %230 = arith.mulf %225, %229 : vector<8x32xf32>
    %231 = tpu.concatenate %187, %209 in 1 : vector<8x32xf32>, vector<8x32xf32> -> vector<8x64xf32>
    %cst_62 = arith.constant dense<0.000000e+00> : vector<8x128xf32>
    %232 = tpu.matmul %231, %7, %cst_62 {dimension_numbers = #tpu.dot_dimension_numbers<[1], [0], [0], [1], [0, 0, 1, 1], [], []>} : vector<8x64xf32>, vector<64x128xf32>, vector<8x128xf32> -> vector<8x128xf32>
    %233 = vector.broadcast %8 : vector<1x128xf32> to vector<8x128xf32>
    %234 = arith.addf %232, %233 : vector<8x128xf32>
    %235 = arith.negf %234 : vector<8x128xf32>
    %236 = math.exp %235 : vector<8x128xf32>
    %cst_63 = arith.constant 1.000000e+00 : f32
    %237 = vector.broadcast %cst_63 : f32 to vector<8x128xf32>
    %238 = arith.addf %237, %236 : vector<8x128xf32>
    %239 = arith.divf %237, %238 : vector<8x128xf32>
    %240 = vector.extract_strided_slice %239 {offsets = [0, 0], sizes = [8, 32], strides = [1, 1]} : vector<8x128xf32> to vector<8x32xf32>
    %241 = vector.extract_strided_slice %239 {offsets = [0, 32], sizes = [8, 32], strides = [1, 1]} : vector<8x128xf32> to vector<8x32xf32>
    %242 = vector.extract_strided_slice %239 {offsets = [0, 64], sizes = [8, 32], strides = [1, 1]} : vector<8x128xf32> to vector<8x32xf32>
    %cst_64 = arith.constant 2.000000e+00 : f32
    %243 = vector.broadcast %cst_64 : f32 to vector<8x32xf32>
    %244 = arith.mulf %243, %242 : vector<8x32xf32>
    %cst_65 = arith.constant 1.000000e+00 : f32
    %245 = vector.broadcast %cst_65 : f32 to vector<8x32xf32>
    %246 = arith.subf %244, %245 : vector<8x32xf32>
    %247 = vector.extract_strided_slice %239 {offsets = [0, 96], sizes = [8, 32], strides = [1, 1]} : vector<8x128xf32> to vector<8x32xf32>
    %248 = arith.mulf %241, %207 : vector<8x32xf32>
    %249 = arith.mulf %240, %246 : vector<8x32xf32>
    %250 = arith.addf %248, %249 : vector<8x32xf32>
    %251 = math.tanh %250 : vector<8x32xf32>
    %252 = arith.mulf %247, %251 : vector<8x32xf32>
    %cst_66 = arith.constant dense<0.000000e+00> : vector<8x128xf32>
    %253 = tpu.matmul %230, %6, %cst_66 {dimension_numbers = #tpu.dot_dimension_numbers<[1], [0], [0], [1], [0, 0, 1, 1], [], []>} : vector<8x32xf32>, vector<32x128xf32>, vector<8x128xf32> -> vector<8x128xf32>
    %254 = vector.extract_strided_slice %5 {offsets = [48, 0], sizes = [8, 128], strides = [1, 1]} : vector<64x128xf32> to vector<8x128xf32>
    %255 = arith.addf %253, %254 : vector<8x128xf32>
    %256 = arith.negf %255 : vector<8x128xf32>
    %257 = math.exp %256 : vector<8x128xf32>
    %cst_67 = arith.constant 1.000000e+00 : f32
    %258 = vector.broadcast %cst_67 : f32 to vector<8x128xf32>
    %259 = arith.addf %258, %257 : vector<8x128xf32>
    %260 = arith.divf %258, %259 : vector<8x128xf32>
    %261 = vector.extract_strided_slice %260 {offsets = [0, 0], sizes = [8, 32], strides = [1, 1]} : vector<8x128xf32> to vector<8x32xf32>
    %262 = vector.extract_strided_slice %260 {offsets = [0, 32], sizes = [8, 32], strides = [1, 1]} : vector<8x128xf32> to vector<8x32xf32>
    %263 = vector.extract_strided_slice %260 {offsets = [0, 64], sizes = [8, 32], strides = [1, 1]} : vector<8x128xf32> to vector<8x32xf32>
    %cst_68 = arith.constant 2.000000e+00 : f32
    %264 = vector.broadcast %cst_68 : f32 to vector<8x32xf32>
    %265 = arith.mulf %264, %263 : vector<8x32xf32>
    %cst_69 = arith.constant 1.000000e+00 : f32
    %266 = vector.broadcast %cst_69 : f32 to vector<8x32xf32>
    %267 = arith.subf %265, %266 : vector<8x32xf32>
    %268 = vector.extract_strided_slice %260 {offsets = [0, 96], sizes = [8, 32], strides = [1, 1]} : vector<8x128xf32> to vector<8x32xf32>
    %269 = arith.mulf %262, %228 : vector<8x32xf32>
    %270 = arith.mulf %261, %267 : vector<8x32xf32>
    %271 = arith.addf %269, %270 : vector<8x32xf32>
    %272 = math.tanh %271 : vector<8x32xf32>
    %273 = arith.mulf %268, %272 : vector<8x32xf32>
    %274 = tpu.concatenate %230, %252 in 1 : vector<8x32xf32>, vector<8x32xf32> -> vector<8x64xf32>
    %cst_70 = arith.constant dense<0.000000e+00> : vector<8x128xf32>
    %275 = tpu.matmul %274, %7, %cst_70 {dimension_numbers = #tpu.dot_dimension_numbers<[1], [0], [0], [1], [0, 0, 1, 1], [], []>} : vector<8x64xf32>, vector<64x128xf32>, vector<8x128xf32> -> vector<8x128xf32>
    %276 = vector.broadcast %8 : vector<1x128xf32> to vector<8x128xf32>
    %277 = arith.addf %275, %276 : vector<8x128xf32>
    %278 = arith.negf %277 : vector<8x128xf32>
    %279 = math.exp %278 : vector<8x128xf32>
    %cst_71 = arith.constant 1.000000e+00 : f32
    %280 = vector.broadcast %cst_71 : f32 to vector<8x128xf32>
    %281 = arith.addf %280, %279 : vector<8x128xf32>
    %282 = arith.divf %280, %281 : vector<8x128xf32>
    %283 = vector.extract_strided_slice %282 {offsets = [0, 0], sizes = [8, 32], strides = [1, 1]} : vector<8x128xf32> to vector<8x32xf32>
    %284 = vector.extract_strided_slice %282 {offsets = [0, 32], sizes = [8, 32], strides = [1, 1]} : vector<8x128xf32> to vector<8x32xf32>
    %285 = vector.extract_strided_slice %282 {offsets = [0, 64], sizes = [8, 32], strides = [1, 1]} : vector<8x128xf32> to vector<8x32xf32>
    %cst_72 = arith.constant 2.000000e+00 : f32
    %286 = vector.broadcast %cst_72 : f32 to vector<8x32xf32>
    %287 = arith.mulf %286, %285 : vector<8x32xf32>
    %cst_73 = arith.constant 1.000000e+00 : f32
    %288 = vector.broadcast %cst_73 : f32 to vector<8x32xf32>
    %289 = arith.subf %287, %288 : vector<8x32xf32>
    %290 = vector.extract_strided_slice %282 {offsets = [0, 96], sizes = [8, 32], strides = [1, 1]} : vector<8x128xf32> to vector<8x32xf32>
    %291 = arith.mulf %284, %250 : vector<8x32xf32>
    %292 = arith.mulf %283, %289 : vector<8x32xf32>
    %293 = arith.addf %291, %292 : vector<8x32xf32>
    %294 = math.tanh %293 : vector<8x32xf32>
    %295 = arith.mulf %290, %294 : vector<8x32xf32>
    %cst_74 = arith.constant dense<0.000000e+00> : vector<8x128xf32>
    %296 = tpu.matmul %273, %6, %cst_74 {dimension_numbers = #tpu.dot_dimension_numbers<[1], [0], [0], [1], [0, 0, 1, 1], [], []>} : vector<8x32xf32>, vector<32x128xf32>, vector<8x128xf32> -> vector<8x128xf32>
    %297 = vector.extract_strided_slice %5 {offsets = [56, 0], sizes = [8, 128], strides = [1, 1]} : vector<64x128xf32> to vector<8x128xf32>
    %298 = arith.addf %296, %297 : vector<8x128xf32>
    %299 = arith.negf %298 : vector<8x128xf32>
    %300 = math.exp %299 : vector<8x128xf32>
    %cst_75 = arith.constant 1.000000e+00 : f32
    %301 = vector.broadcast %cst_75 : f32 to vector<8x128xf32>
    %302 = arith.addf %301, %300 : vector<8x128xf32>
    %303 = arith.divf %301, %302 : vector<8x128xf32>
    %304 = vector.extract_strided_slice %303 {offsets = [0, 0], sizes = [8, 32], strides = [1, 1]} : vector<8x128xf32> to vector<8x32xf32>
    %305 = vector.extract_strided_slice %303 {offsets = [0, 32], sizes = [8, 32], strides = [1, 1]} : vector<8x128xf32> to vector<8x32xf32>
    %306 = vector.extract_strided_slice %303 {offsets = [0, 64], sizes = [8, 32], strides = [1, 1]} : vector<8x128xf32> to vector<8x32xf32>
    %cst_76 = arith.constant 2.000000e+00 : f32
    %307 = vector.broadcast %cst_76 : f32 to vector<8x32xf32>
    %308 = arith.mulf %307, %306 : vector<8x32xf32>
    %cst_77 = arith.constant 1.000000e+00 : f32
    %309 = vector.broadcast %cst_77 : f32 to vector<8x32xf32>
    %310 = arith.subf %308, %309 : vector<8x32xf32>
    %311 = vector.extract_strided_slice %303 {offsets = [0, 96], sizes = [8, 32], strides = [1, 1]} : vector<8x128xf32> to vector<8x32xf32>
    %312 = arith.mulf %305, %271 : vector<8x32xf32>
    %313 = arith.mulf %304, %310 : vector<8x32xf32>
    %314 = arith.addf %312, %313 : vector<8x32xf32>
    %315 = math.tanh %314 : vector<8x32xf32>
    %316 = arith.mulf %311, %315 : vector<8x32xf32>
    %317 = tpu.concatenate %273, %295 in 1 : vector<8x32xf32>, vector<8x32xf32> -> vector<8x64xf32>
    %cst_78 = arith.constant dense<0.000000e+00> : vector<8x128xf32>
    %318 = tpu.matmul %317, %7, %cst_78 {dimension_numbers = #tpu.dot_dimension_numbers<[1], [0], [0], [1], [0, 0, 1, 1], [], []>} : vector<8x64xf32>, vector<64x128xf32>, vector<8x128xf32> -> vector<8x128xf32>
    %319 = vector.broadcast %8 : vector<1x128xf32> to vector<8x128xf32>
    %320 = arith.addf %318, %319 : vector<8x128xf32>
    %321 = arith.negf %320 : vector<8x128xf32>
    %322 = math.exp %321 : vector<8x128xf32>
    %cst_79 = arith.constant 1.000000e+00 : f32
    %323 = vector.broadcast %cst_79 : f32 to vector<8x128xf32>
    %324 = arith.addf %323, %322 : vector<8x128xf32>
    %325 = arith.divf %323, %324 : vector<8x128xf32>
    %326 = vector.extract_strided_slice %325 {offsets = [0, 0], sizes = [8, 32], strides = [1, 1]} : vector<8x128xf32> to vector<8x32xf32>
    %327 = vector.extract_strided_slice %325 {offsets = [0, 32], sizes = [8, 32], strides = [1, 1]} : vector<8x128xf32> to vector<8x32xf32>
    %328 = vector.extract_strided_slice %325 {offsets = [0, 64], sizes = [8, 32], strides = [1, 1]} : vector<8x128xf32> to vector<8x32xf32>
    %cst_80 = arith.constant 2.000000e+00 : f32
    %329 = vector.broadcast %cst_80 : f32 to vector<8x32xf32>
    %330 = arith.mulf %329, %328 : vector<8x32xf32>
    %cst_81 = arith.constant 1.000000e+00 : f32
    %331 = vector.broadcast %cst_81 : f32 to vector<8x32xf32>
    %332 = arith.subf %330, %331 : vector<8x32xf32>
    %333 = vector.extract_strided_slice %325 {offsets = [0, 96], sizes = [8, 32], strides = [1, 1]} : vector<8x128xf32> to vector<8x32xf32>
    %334 = arith.mulf %327, %293 : vector<8x32xf32>
    %335 = arith.mulf %326, %332 : vector<8x32xf32>
    %336 = arith.addf %334, %335 : vector<8x32xf32>
    %337 = math.tanh %336 : vector<8x32xf32>
    %338 = arith.mulf %333, %337 : vector<8x32xf32>
    %339 = tpu.concatenate %316, %338 in 1 : vector<8x32xf32>, vector<8x32xf32> -> vector<8x64xf32>
    %cst_82 = arith.constant dense<0.000000e+00> : vector<8x128xf32>
    %340 = tpu.matmul %339, %7, %cst_82 {dimension_numbers = #tpu.dot_dimension_numbers<[1], [0], [0], [1], [0, 0, 1, 1], [], []>} : vector<8x64xf32>, vector<64x128xf32>, vector<8x128xf32> -> vector<8x128xf32>
    %341 = vector.broadcast %8 : vector<1x128xf32> to vector<8x128xf32>
    %342 = arith.addf %340, %341 : vector<8x128xf32>
    %343 = arith.negf %342 : vector<8x128xf32>
    %344 = math.exp %343 : vector<8x128xf32>
    %cst_83 = arith.constant 1.000000e+00 : f32
    %345 = vector.broadcast %cst_83 : f32 to vector<8x128xf32>
    %346 = arith.addf %345, %344 : vector<8x128xf32>
    %347 = arith.divf %345, %346 : vector<8x128xf32>
    %348 = vector.extract_strided_slice %347 {offsets = [0, 0], sizes = [8, 32], strides = [1, 1]} : vector<8x128xf32> to vector<8x32xf32>
    %349 = vector.extract_strided_slice %347 {offsets = [0, 32], sizes = [8, 32], strides = [1, 1]} : vector<8x128xf32> to vector<8x32xf32>
    %350 = vector.extract_strided_slice %347 {offsets = [0, 64], sizes = [8, 32], strides = [1, 1]} : vector<8x128xf32> to vector<8x32xf32>
    %cst_84 = arith.constant 2.000000e+00 : f32
    %351 = vector.broadcast %cst_84 : f32 to vector<8x32xf32>
    %352 = arith.mulf %351, %350 : vector<8x32xf32>
    %cst_85 = arith.constant 1.000000e+00 : f32
    %353 = vector.broadcast %cst_85 : f32 to vector<8x32xf32>
    %354 = arith.subf %352, %353 : vector<8x32xf32>
    %355 = vector.extract_strided_slice %347 {offsets = [0, 96], sizes = [8, 32], strides = [1, 1]} : vector<8x128xf32> to vector<8x32xf32>
    %356 = arith.mulf %349, %336 : vector<8x32xf32>
    %357 = arith.mulf %348, %354 : vector<8x32xf32>
    %358 = arith.addf %356, %357 : vector<8x32xf32>
    %359 = math.tanh %358 : vector<8x32xf32>
    %360 = arith.mulf %355, %359 : vector<8x32xf32>
    %c0_86 = arith.constant 0 : index
    %c0_87 = arith.constant 0 : index
    %361 = vector.load %arg8[%c0_86, %c0_87] : memref<32x128xf32, #tpu.memory_space<vmem>>, vector<32x128xf32>
    %cst_88 = arith.constant dense<0.000000e+00> : vector<8x128xf32>
    %362 = tpu.matmul %360, %361, %cst_88 {dimension_numbers = #tpu.dot_dimension_numbers<[1], [0], [0], [1], [0, 0, 1, 1], [], []>} : vector<8x32xf32>, vector<32x128xf32>, vector<8x128xf32> -> vector<8x128xf32>
    %c0_89 = arith.constant 0 : index
    %c0_90 = arith.constant 0 : index
    %363 = vector.load %arg9[%c0_89, %c0_90] : memref<1x128xf32, #tpu.memory_space<vmem>>, vector<1x128xf32>
    %364 = vector.broadcast %363 : vector<1x128xf32> to vector<8x128xf32>
    %365 = arith.addf %362, %364 : vector<8x128xf32>
    %c0_91 = arith.constant 0 : index
    %c0_92 = arith.constant 0 : index
    %366 = vector.load %arg10[%c0_91, %c0_92] : memref<8x128xf32, #tpu.memory_space<vmem>>, vector<8x128xf32>
    tpu.vector_store %arg10[%c0_91, %c0_92], %365 {strides = array<i32>} : memref<8x128xf32, #tpu.memory_space<vmem>>, vector<8x128xf32>,
    return
  }
}

</mosaic_0001>

<llo_original>
// kernel: tpu_custom_call.1
$region0: #{tpu_custom_call.1}
  #allocation0 [shape = 'u32[]', space=smem, size = 0x4, offset = 0x4, fixed_abs, tag = 'smem constant byte address 0x4 - core index']
  #allocation1 [shape = 'u32[144,128]{1,0:T(1,128)}', space=vmem, size = 0x12000, scoped, tag = 'internal scratch']
  %s0 = inlined_call_operand.vmem [shape: f32[64,16], index: 0, kind: input, shape index: {}]
  %s1 = inlined_call_operand.vmem [shape: f32[2,8,32], index: 1, kind: input, shape index: {}]
  %s2 = inlined_call_operand.hbm [shape: f32[2,8,32], index: 2, kind: input, shape index: {}]
  %s3 = inlined_call_operand.hbm [shape: f32[16,128], index: 3, kind: input, shape index: {}]
  %s4 = inlined_call_operand.hbm [shape: f32[32,128], index: 4, kind: input, shape index: {}]
  %s5 = inlined_call_operand.vmem [shape: f32[1,128], index: 5, kind: input, shape index: {}]
  %s6 = inlined_call_operand.vmem [shape: f32[64,128], index: 6, kind: input, shape index: {}]
  %s7 = inlined_call_operand.vmem [shape: f32[1,128], index: 7, kind: input, shape index: {}]
  %s8 = inlined_call_operand.hbm [shape: f32[32,128], index: 8, kind: input, shape index: {}]
  %s9 = inlined_call_operand.vmem [shape: f32[1,128], index: 9, kind: input, shape index: {}]
  %s10 = inlined_call_operand.hbm [shape: f32[8,128], index: 10, kind: output, shape index: {}]
  %s11 = sld [smem:[#allocation0]]
  $region66: #{tpu_custom_call.1} parent=0
    _
  %s13 = ssub.s32 1, %s11
  %s14 = scalar_select 0, %s13, %s11
  $region1: #{tpu_custom_call.1} parent=0
    #allocation2 [shape = 'u8[8192]{0}', space=vmem, size = 0x2000, scoped, tag = 'input window, operand 2, single buffered']
    #allocation3 [shape = 's32[1]{0}', space=sflag, size = 0x4, scoped, tag = 'scoped memory for tpu_custom_call.1']
    #allocation4 [shape = 's32[1]{0}', space=sflag, size = 0x4, scoped, tag = 'scoped memory for tpu_custom_call.1']
    #allocation5 [shape = 'u8[8192]{0}', space=vmem, size = 0x2000, scoped, tag = 'input window, operand 3, single buffered']
    #allocation6 [shape = 's32[1]{0}', space=sflag, size = 0x4, scoped, tag = 'scoped memory for tpu_custom_call.1']
    #allocation7 [shape = 'u8[16384]{0}', space=vmem, size = 0x4000, scoped, tag = 'input window, operand 4, single buffered']
    #allocation8 [shape = 'u8[16384]{0}', space=vmem, size = 0x4000, scoped, tag = 'input window, operand 8, single buffered']
    #allocation9 [shape = 's32[1]{0}', space=sflag, size = 0x4, scoped, tag = 'scoped memory for tpu_custom_call.1']
    #allocation10 [shape = 'u8[4096]{0}', space=vmem, size = 0x1000, scoped, tag = 'output window, operand 0, single buffered']
    %15 = vsyncpa [#allocation3], 0
    %16 = vsyncpa [#allocation6], 0
    %17 = vsyncpa [#allocation9], 0
    %18 = vsyncpa [#allocation4], 0
    // Predicated region
    $region2: #{tpu_custom_call.1} parent=1 // pred_check
      _
    $region3: #{tpu_custom_call.1} parent=1 // pred_check_branch
      %20 = sbr.rel (0) target = $region5
    $region4: #{tpu_custom_call.1} parent=1 // pred_region
      _
    $region5: #{tpu_custom_call.1} parent=1 // pred_fallthru
      _
    // Predicated region
    $region6: #{tpu_custom_call.1} parent=1 // pred_check
      _
    $region7: #{tpu_custom_call.1} parent=1 // pred_check_branch
      %22 = sbr.rel (0) target = $region9
    $region8: #{tpu_custom_call.1} parent=1 // pred_region
      _
    $region9: #{tpu_custom_call.1} parent=1 // pred_fallthru
      _
    // Predicated region
    $region10: #{tpu_custom_call.1} parent=1 // pred_check
      _
    $region11: #{tpu_custom_call.1} parent=1 // pred_check_branch
      %24 = sbr.rel (0) target = $region13
    $region12: #{tpu_custom_call.1} parent=1 // pred_region
      %s26 = ssub.s32 256, 256
      %27 = vsyncadd [#allocation3], %s26
      %s28 = sshll.u32 [#allocation2], 4
      %s29 = int_to_ptr.vmem [resolvable:$true] %s28
      %34 = dma.hbm_to_vmem [thread:$0]  %s2, 256, %s29, [#allocation3], 128, 128, 8
    $region13: #{tpu_custom_call.1} parent=1 // pred_fallthru
      _
    // Predicated region
    $region14: #{tpu_custom_call.1} parent=1 // pred_check
      _
    $region15: #{tpu_custom_call.1} parent=1 // pred_check_branch
      %36 = sbr.rel (0) target = $region17
    $region16: #{tpu_custom_call.1} parent=1 // pred_region
      %s38 = ssub.s32 256, 256
      %39 = vsyncadd [#allocation6], %s38
      %s40 = sshll.u32 [#allocation5], 4
      %s41 = int_to_ptr.vmem [resolvable:$true] %s40
      %46 = dma.hbm_to_vmem [thread:$0]  %s3, 256, %s41, [#allocation6], 128, 128, 8
    $region17: #{tpu_custom_call.1} parent=1 // pred_fallthru
      _
    // Predicated region
    $region18: #{tpu_custom_call.1} parent=1 // pred_check
      _
    $region19: #{tpu_custom_call.1} parent=1 // pred_check_branch
      %48 = sbr.rel (0) target = $region21
    $region20: #{tpu_custom_call.1} parent=1 // pred_region
      %s50 = ssub.s32 512, 512
      %51 = vsyncadd [#allocation6], %s50
      %s52 = sshll.u32 [#allocation7], 4
      %s53 = int_to_ptr.vmem [resolvable:$true] %s52
      %58 = dma.hbm_to_vmem [thread:$0]  %s4, 512, %s53, [#allocation6], 128, 128, 8
    $region21: #{tpu_custom_call.1} parent=1 // pred_fallthru
      _
    // Predicated region
    $region22: #{tpu_custom_call.1} parent=1 // pred_check
      _
    $region23: #{tpu_custom_call.1} parent=1 // pred_check_branch
      %60 = sbr.rel (0) target = $region25
    $region24: #{tpu_custom_call.1} parent=1 // pred_region
      _
    $region25: #{tpu_custom_call.1} parent=1 // pred_fallthru
      _
    // Predicated region
    $region26: #{tpu_custom_call.1} parent=1 // pred_check
      _
    $region27: #{tpu_custom_call.1} parent=1 // pred_check_branch
      %62 = sbr.rel (0) target = $region29
    $region28: #{tpu_custom_call.1} parent=1 // pred_region
      _
    $region29: #{tpu_custom_call.1} parent=1 // pred_fallthru
      _
    // Predicated region
    $region30: #{tpu_custom_call.1} parent=1 // pred_check
      _
    $region31: #{tpu_custom_call.1} parent=1 // pred_check_branch
      %64 = sbr.rel (0) target = $region33
    $region32: #{tpu_custom_call.1} parent=1 // pred_region
      _
    $region33: #{tpu_custom_call.1} parent=1 // pred_fallthru
      _
    // Predicated region
    $region34: #{tpu_custom_call.1} parent=1 // pred_check
      _
    $region35: #{tpu_custom_call.1} parent=1 // pred_check_branch
      %66 = sbr.rel (0) target = $region37
    $region36: #{tpu_custom_call.1} parent=1 // pred_region
      %s68 = ssub.s32 512, 512
      %69 = vsyncadd [#allocation9], %s68
      %s70 = sshll.u32 [#allocation8], 4
      %s71 = int_to_ptr.vmem [resolvable:$true] %s70
      %76 = dma.hbm_to_vmem [thread:$0]  %s8, 512, %s71, [#allocation9], 128, 128, 8
    $region37: #{tpu_custom_call.1} parent=1 // pred_fallthru
      _
    // Predicated region
    $region38: #{tpu_custom_call.1} parent=1 // pred_check
      _
    $region39: #{tpu_custom_call.1} parent=1 // pred_check_branch
      %78 = sbr.rel (0) target = $region41
    $region40: #{tpu_custom_call.1} parent=1 // pred_region
      _
    $region41: #{tpu_custom_call.1} parent=1 // pred_fallthru
      _
    // Predicated region
    $region42: #{tpu_custom_call.1} parent=1 // pred_check
      _
    $region43: #{tpu_custom_call.1} parent=1 // pred_check_branch
      %80 = sbr.rel (0) target = $region45
    $region44: #{tpu_custom_call.1} parent=1 // pred_region
      %81 = dma.done [#allocation3], 256
    $region45: #{tpu_custom_call.1} parent=1 // pred_fallthru
      _
    // Predicated region
    $region46: #{tpu_custom_call.1} parent=1 // pred_check
      _
    $region47: #{tpu_custom_call.1} parent=1 // pred_check_branch
      %83 = sbr.rel (0) target = $region49
    $region48: #{tpu_custom_call.1} parent=1 // pred_region
      %84 = dma.done [#allocation6], 256
    $region49: #{tpu_custom_call.1} parent=1 // pred_fallthru
      _
    // Predicated region
    $region50: #{tpu_custom_call.1} parent=1 // pred_check
      _
    $region51: #{tpu_custom_call.1} parent=1 // pred_check_branch
      %86 = sbr.rel (0) target = $region53
    $region52: #{tpu_custom_call.1} parent=1 // pred_region
      %87 = dma.done [#allocation6], 512
    $region53: #{tpu_custom_call.1} parent=1 // pred_fallthru
      _
    // Predicated region
    $region54: #{tpu_custom_call.1} parent=1 // pred_check
      _
    $region55: #{tpu_custom_call.1} parent=1 // pred_check_branch
      %89 = sbr.rel (0) target = $region57
    $region56: #{tpu_custom_call.1} parent=1 // pred_region
      %90 = dma.done [#allocation9], 512
    $region57: #{tpu_custom_call.1} parent=1 // pred_fallthru
      _
    %v91 = vld [vmem:[%s0] sm:$0xff]
    %v92 = vld [vmem:[%s0 + $0x8] sm:$0xff]
    %v93 = vld [vmem:[%s0 + $0x10] sm:$0xff]
    %v94 = vld [vmem:[%s0 + $0x18] sm:$0xff]
    %v95 = vld [vmem:[%s0 + $0x20] sm:$0xff]
    %v96 = vld [vmem:[%s0 + $0x28] sm:$0xff]
    %v97 = vld [vmem:[%s0 + $0x30] sm:$0xff]
    %v98 = vld [vmem:[%s0 + $0x38] sm:$0xff]
    %v99 = vld [vmem:[#allocation5] sm:$0xff]
    %v100 = vld [vmem:[#allocation5 + $0x8] sm:$0xff]
    %v101 = vld [vmem:[%s5] sm:$0x1]
    %v103 = vlaneseq
    %v104 = vshrl.u32 %v103, 7
    %v105 = vsub.s32 0, %v104
    %v106 = vrot.slane %v101, %v105
    %vm108 = vcmask 130048
    %v110 = vsel %vm108, %v91, 0
    %v113 = vsel %vm108, %v92, 0
    %v116 = vsel %vm108, %v93, 0
    %v119 = vsel %vm108, %v94, 0
    %v122 = vsel %vm108, %v95, 0
    %v125 = vsel %vm108, %v96, 0
    %v128 = vsel %vm108, %v97, 0
    %v131 = vsel %vm108, %v98, 0
    %133 = vmatprep.subr.mxu0 0.0
    %134 = vmatpush1.msra.mxu0 0.0
    %135 = vmatprep.subr.mxu0 0.0
    %136 = vmatpush1.msra.mxu0 0.0
    %137 = vmatprep.subr.mxu0 0.0
    %138 = vmatpush1.msra.mxu0 0.0
    %139 = vmatprep.subr.mxu0 0.0
    %140 = vmatpush1.msra.mxu0 0.0
    %141 = vmatprep.subr.mxu0 0.0
    %142 = vmatpush1.msra.mxu0 0.0
    %143 = vmatprep.subr.mxu0 0.0
    %144 = vmatpush1.msra.mxu0 0.0
    %145 = vmatprep.subr.mxu0 0.0
    %146 = vmatpush1.msra.mxu0 0.0
    %147 = vmatprep.subr.mxu0 0.0
    %148 = vmatpush1.msra.mxu0 0.0
    %149 = vmatprep.subr.mxu0 0.0
    %150 = vmatpush1.msra.mxu0 0.0
    %151 = vmatprep.subr.mxu0 0.0
    %152 = vmatpush1.msra.mxu0 0.0
    %153 = vmatprep.subr.mxu0 0.0
    %154 = vmatpush1.msra.mxu0 0.0
    %155 = vmatprep.subr.mxu0 0.0
    %156 = vmatpush1.msra.mxu0 0.0
    %157 = vmatprep.subr.mxu0 0.0
    %158 = vmatpush1.msra.mxu0 0.0
    %159 = vmatprep.subr.mxu0 0.0
    %160 = vmatpush1.msra.mxu0 0.0
    %161 = vmatprep.subr.mxu0 0.0
    %162 = vmatpush1.msra.mxu0 %v100
    %163 = vmatprep.subr.mxu0 0.0
    %164 = vmatpush1.msra.mxu0 %v99
    %165 = vmatprep.subr.mxu0 0.0
    %166 = vmatpush2.msra.mxu0 0.0
    %167 = vmatprep.subr.mxu0 0.0
    %168 = vmatpush2.msra.mxu0 0.0
    %169 = vmatprep.subr.mxu0 0.0
    %170 = vmatpush2.msra.mxu0 0.0
    %171 = vmatprep.subr.mxu0 0.0
    %172 = vmatpush2.msra.mxu0 0.0
    %173 = vmatprep.subr.mxu0 0.0
    %174 = vmatpush2.msra.mxu0 0.0
    %175 = vmatprep.subr.mxu0 0.0
    %176 = vmatpush2.msra.mxu0 0.0
    %177 = vmatprep.subr.mxu0 0.0
    %178 = vmatpush2.msra.mxu0 0.0
    %179 = vmatprep.subr.mxu0 0.0
    %180 = vmatpush2.msra.mxu0 0.0
    %181 = vmatprep.subr.mxu0 0.0
    %182 = vmatpush2.msra.mxu0 0.0
    %183 = vmatprep.subr.mxu0 0.0
    %184 = vmatpush2.msra.mxu0 0.0
    %185 = vmatprep.subr.mxu0 0.0
    %186 = vmatpush2.msra.mxu0 0.0
    %187 = vmatprep.subr.mxu0 0.0
    %188 = vmatpush2.msra.mxu0 0.0
    %189 = vmatprep.subr.mxu0 0.0
    %190 = vmatpush2.msra.mxu0 0.0
    %191 = vmatprep.subr.mxu0 0.0
    %192 = vmatpush2.msra.mxu0 0.0
    %193 = vmatprep.subr.mxu0 0.0
    %194 = vmatpush2.msra.mxu0 0.0
    %195 = vmatprep.subr.mxu0 0.0
    %196 = vmatpush2.msra.mxu0 0.0
    %197 = vmatprep.mubr.f32.mxu0 0.0
    %198 = vmatmul.mubr.f32.gmra.mxu0 %v110
    %v199 = vpop.f32.mrf.mxu0
    %v200 = vadd.f32 %v106, %v199
    %v201 = vpop.f32.mrf.mxu0
    %202 = vmatprep.mubr.f32.mxu0 0.0
    %203 = vmatmul.mubr.f32.gmra.mxu0 %v113
    %v204 = vpop.f32.mrf.mxu0
    %v205 = vadd.f32 %v106, %v204
    %v206 = vpop.f32.mrf.mxu0
    %207 = vmatprep.mubr.f32.mxu0 0.0
    %208 = vmatmul.mubr.f32.gmra.mxu0 %v116
    %v209 = vpop.f32.mrf.mxu0
    %v210 = vadd.f32 %v106, %v209
    %v211 = vpop.f32.mrf.mxu0
    %212 = vmatprep.mubr.f32.mxu0 0.0
    %213 = vmatmul.mubr.f32.gmra.mxu0 %v119
    %v214 = vpop.f32.mrf.mxu0
    %v215 = vadd.f32 %v106, %v214
    %v216 = vpop.f32.mrf.mxu0
    %217 = vmatprep.mubr.f32.mxu0 0.0
    %218 = vmatmul.mubr.f32.gmra.mxu0 %v122
    %v219 = vpop.f32.mrf.mxu0
    %v220 = vadd.f32 %v106, %v219
    %v221 = vpop.f32.mrf.mxu0
    %222 = vmatprep.mubr.f32.mxu0 0.0
    %223 = vmatmul.mubr.f32.gmra.mxu0 %v125
    %v224 = vpop.f32.mrf.mxu0
    %v225 = vadd.f32 %v106, %v224
    %v226 = vpop.f32.mrf.mxu0
    %227 = vmatprep.mubr.f32.mxu0 0.0
    %228 = vmatmul.mubr.f32.gmra.mxu0 %v128
    %v229 = vpop.f32.mrf.mxu0
    %v230 = vadd.f32 %v106, %v229
    %v231 = vpop.f32.mrf.mxu0
    %232 = vmatprep.mubr.f32.mxu0 0.0
    %233 = vmatmul.mubr.f32.gmra.mxu0 %v131
    %v234 = vpop.f32.mrf.mxu0
    %v235 = vadd.f32 %v106, %v234
    %v236 = vpop.f32.mrf.mxu0
    %237 = vdwg.mxu0
    %v238 = vld [vmem:[#allocation7] sm:$0xff]
    %v239 = vld [vmem:[#allocation7 + $0x8] sm:$0xff]
    %v240 = vld [vmem:[#allocation7 + $0x10] sm:$0xff]
    %v241 = vld [vmem:[#allocation7 + $0x18] sm:$0xff]
    %v242 = vld [vmem:[%s6] sm:$0xff]
    %v243 = vld [vmem:[%s6 + $0x8] sm:$0xff]
    %v244 = vld [vmem:[%s6 + $0x10] sm:$0xff]
    %v245 = vld [vmem:[%s6 + $0x18] sm:$0xff]
    %v246 = vld [vmem:[%s6 + $0x20] sm:$0xff]
    %v247 = vld [vmem:[%s6 + $0x28] sm:$0xff]
    %v248 = vld [vmem:[%s6 + $0x30] sm:$0xff]
    %v249 = vld [vmem:[%s6 + $0x38] sm:$0xff]
    %v250 = vld [vmem:[%s7] sm:$0x1]
    %v251 = vld [vmem:[%s1] sm:$0xff]
    %s252 = scalar_lea.vmem %s1, 8
    %v253 = vld [vmem:[%s252] sm:$0xff]
    %v254 = vld [vmem:[#allocation2] sm:$0xff]
    %s255 = scalar_lea.vmem [#allocation2], 8
    %v256 = vld [vmem:[%s255] sm:$0xff]
    %vm257 = vcmask 261120
    %v259 = vsel %vm257, %v251, 0
    %261 = vmatprep.subr.mxu0 0.0
    %262 = vmatpush1.msra.mxu0 0.0
    %263 = vmatprep.subr.mxu0 0.0
    %264 = vmatpush1.msra.mxu0 0.0
    %265 = vmatprep.subr.mxu0 0.0
    %266 = vmatpush1.msra.mxu0 0.0
    %267 = vmatprep.subr.mxu0 0.0
    %268 = vmatpush1.msra.mxu0 0.0
    %269 = vmatprep.subr.mxu0 0.0
    %270 = vmatpush1.msra.mxu0 0.0
    %271 = vmatprep.subr.mxu0 0.0
    %272 = vmatpush1.msra.mxu0 0.0
    %273 = vmatprep.subr.mxu0 0.0
    %274 = vmatpush1.msra.mxu0 0.0
    %275 = vmatprep.subr.mxu0 0.0
    %276 = vmatpush1.msra.mxu0 0.0
    %277 = vmatprep.subr.mxu0 0.0
    %278 = vmatpush1.msra.mxu0 0.0
    %279 = vmatprep.subr.mxu0 0.0
    %280 = vmatpush1.msra.mxu0 0.0
    %281 = vmatprep.subr.mxu0 0.0
    %282 = vmatpush1.msra.mxu0 0.0
    %283 = vmatprep.subr.mxu0 0.0
    %284 = vmatpush1.msra.mxu0 0.0
    %285 = vmatprep.subr.mxu0 0.0
    %286 = vmatpush1.msra.mxu0 %v241
    %287 = vmatprep.subr.mxu0 0.0
    %288 = vmatpush1.msra.mxu0 %v240
    %289 = vmatprep.subr.mxu0 0.0
    %290 = vmatpush1.msra.mxu0 %v239
    %291 = vmatprep.subr.mxu0 0.0
    %292 = vmatpush1.msra.mxu0 %v238
    %293 = vmatprep.subr.mxu0 0.0
    %294 = vmatpush2.msra.mxu0 0.0
    %295 = vmatprep.subr.mxu0 0.0
    %296 = vmatpush2.msra.mxu0 0.0
    %297 = vmatprep.subr.mxu0 0.0
    %298 = vmatpush2.msra.mxu0 0.0
    %299 = vmatprep.subr.mxu0 0.0
    %300 = vmatpush2.msra.mxu0 0.0
    %301 = vmatprep.subr.mxu0 0.0
    %302 = vmatpush2.msra.mxu0 0.0
    %303 = vmatprep.subr.mxu0 0.0
    %304 = vmatpush2.msra.mxu0 0.0
    %305 = vmatprep.subr.mxu0 0.0
    %306 = vmatpush2.msra.mxu0 0.0
    %307 = vmatprep.subr.mxu0 0.0
    %308 = vmatpush2.msra.mxu0 0.0
    %309 = vmatprep.subr.mxu0 0.0
    %310 = vmatpush2.msra.mxu0 0.0
    %311 = vmatprep.subr.mxu0 0.0
    %312 = vmatpush2.msra.mxu0 0.0
    %313 = vmatprep.subr.mxu0 0.0
    %314 = vmatpush2.msra.mxu0 0.0
    %315 = vmatprep.subr.mxu0 0.0
    %316 = vmatpush2.msra.mxu0 0.0
    %317 = vmatprep.subr.mxu0 0.0
    %318 = vmatpush2.msra.mxu0 0.0
    %319 = vmatprep.subr.mxu0 0.0
    %320 = vmatpush2.msra.mxu0 0.0
    %321 = vmatprep.subr.mxu0 0.0
    %322 = vmatpush2.msra.mxu0 0.0
    %323 = vmatprep.subr.mxu0 0.0
    %324 = vmatpush2.msra.mxu0 0.0
    %325 = vmatprep.mubr.f32.mxu0 0.0
    %326 = vmatmul.mubr.f32.gmra.mxu0 %v259
    %v327 = vpop.f32.mrf.mxu0
    %v328 = vadd.f32 %v200, %v327
    %v329 = vpop.f32.mrf.mxu0
    %330 = vdwg.mxu0
    %v331 = vxor.u32 %v328, 2147483648
    %v332 = vmul.f32 %v331, 1.442695
    %v333 = vpow.pop %v332
    %v334 = vadd.f32 %v333, 1.0
    %v335 = vrcp.pop %v334
    %v336 = vmul.f32 1.0, %v335
    %v337 = vmul.f32 %v336, 2.0
    %v338 = vsub.f32 %v337, 1.0
    %340 = vrot.lane.b32.xlu0 %v254, 32
    %v341 = vpop.permute.xlu0 %340
    %v343 = vmul.f32 %v336, %v341
    %345 = vrot.lane.b32.xlu0 %v338, 64
    %v346 = vpop.permute.xlu0 %345
    %v348 = vmul.f32 %v336, %v346
    %350 = vrot.lane.b32.xlu0 %v348, 32
    %v351 = vpop.permute.xlu0 %350
    %v353 = vadd.f32 %v343, %v351
    %v354 = vtanh.pop %v353
    %356 = vrot.lane.b32.xlu0 %v354, 64
    %v357 = vpop.permute.xlu0 %356
    %v359 = vmul.f32 %v336, %v357
    %361 = vrot.lane.b32.xlu0 %v359, 32
    %v362 = vpop.permute.xlu0 %361
    %v363 = vsel %vm257, %v362, 0
    %365 = vmatprep.subr.mxu0 0.0
    %366 = vmatpush1.msra.mxu0 0.0
    %367 = vmatprep.subr.mxu0 0.0
    %368 = vmatpush1.msra.mxu0 0.0
    %369 = vmatprep.subr.mxu0 0.0
    %370 = vmatpush1.msra.mxu0 0.0
    %371 = vmatprep.subr.mxu0 0.0
    %372 = vmatpush1.msra.mxu0 0.0
    %373 = vmatprep.subr.mxu0 0.0
    %374 = vmatpush1.msra.mxu0 0.0
    %375 = vmatprep.subr.mxu0 0.0
    %376 = vmatpush1.msra.mxu0 0.0
    %377 = vmatprep.subr.mxu0 0.0
    %378 = vmatpush1.msra.mxu0 0.0
    %379 = vmatprep.subr.mxu0 0.0
    %380 = vmatpush1.msra.mxu0 0.0
    %381 = vmatprep.subr.mxu0 0.0
    %382 = vmatpush1.msra.mxu0 0.0
    %383 = vmatprep.subr.mxu0 0.0
    %384 = vmatpush1.msra.mxu0 0.0
    %385 = vmatprep.subr.mxu0 0.0
    %386 = vmatpush1.msra.mxu0 0.0
    %387 = vmatprep.subr.mxu0 0.0
    %388 = vmatpush1.msra.mxu0 0.0
    %389 = vmatprep.subr.mxu0 0.0
    %390 = vmatpush1.msra.mxu0 %v241
    %391 = vmatprep.subr.mxu0 0.0
    %392 = vmatpush1.msra.mxu0 %v240
    %393 = vmatprep.subr.mxu0 0.0
    %394 = vmatpush1.msra.mxu0 %v239
    %395 = vmatprep.subr.mxu0 0.0
    %396 = vmatpush1.msra.mxu0 %v238
    %397 = vmatprep.subr.mxu0 0.0
    %398 = vmatpush2.msra.mxu0 0.0
    %399 = vmatprep.subr.mxu0 0.0
    %400 = vmatpush2.msra.mxu0 0.0
    %401 = vmatprep.subr.mxu0 0.0
    %402 = vmatpush2.msra.mxu0 0.0
    %403 = vmatprep.subr.mxu0 0.0
    %404 = vmatpush2.msra.mxu0 0.0
    %405 = vmatprep.subr.mxu0 0.0
    %406 = vmatpush2.msra.mxu0 0.0
    %407 = vmatprep.subr.mxu0 0.0
    %408 = vmatpush2.msra.mxu0 0.0
    %409 = vmatprep.subr.mxu0 0.0
    %410 = vmatpush2.msra.mxu0 0.0
    %411 = vmatprep.subr.mxu0 0.0
    %412 = vmatpush2.msra.mxu0 0.0
    %413 = vmatprep.subr.mxu0 0.0
    %414 = vmatpush2.msra.mxu0 0.0
    %415 = vmatprep.subr.mxu0 0.0
    %416 = vmatpush2.msra.mxu0 0.0
    %417 = vmatprep.subr.mxu0 0.0
    %418 = vmatpush2.msra.mxu0 0.0
    %419 = vmatprep.subr.mxu0 0.0
    %420 = vmatpush2.msra.mxu0 0.0
    %421 = vmatprep.subr.mxu0 0.0
    %422 = vmatpush2.msra.mxu0 0.0
    %423 = vmatprep.subr.mxu0 0.0
    %424 = vmatpush2.msra.mxu0 0.0
    %425 = vmatprep.subr.mxu0 0.0
    %426 = vmatpush2.msra.mxu0 0.0
    %427 = vmatprep.subr.mxu0 0.0
    %428 = vmatpush2.msra.mxu0 0.0
    %429 = vmatprep.mubr.f32.mxu0 0.0
    %430 = vmatmul.mubr.f32.gmra.mxu0 %v363
    %v431 = vpop.f32.mrf.mxu0
    %v432 = vadd.f32 %v205, %v431
    %v433 = vpop.f32.mrf.mxu0
    %434 = vdwg.mxu0
    %v435 = vxor.u32 %v432, 2147483648
    %v436 = vmul.f32 %v435, 1.442695
    %v437 = vpow.pop %v436
    %v438 = vadd.f32 %v437, 1.0
    %v439 = vrcp.pop %v438
    %v440 = vmul.f32 1.0, %v439
    %v441 = vmul.f32 %v440, 2.0
    %v442 = vsub.f32 %v441, 1.0
    %v443 = vmul.f32 %v440, %v353
    %445 = vrot.lane.b32.xlu0 %v442, 64
    %v446 = vpop.permute.xlu0 %445
    %v448 = vmul.f32 %v440, %v446
    %450 = vrot.lane.b32.xlu0 %v448, 32
    %v451 = vpop.permute.xlu0 %450
    %v453 = vadd.f32 %v443, %v451
    %v454 = vtanh.pop %v453
    %456 = vrot.lane.b32.xlu0 %v454, 64
    %v457 = vpop.permute.xlu0 %456
    %v459 = vmul.f32 %v440, %v457
    %462 = vrot.lane.b32.xlu0 %v253, 32
    %v463 = vpop.permute.xlu0 %462
    %v465 = vsel %vm257, %v362, %v463
    %v467 = vlaneseq
    %v468 = vshrl.u32 %v467, 7
    %v469 = vsub.s32 0, %v468
    %v470 = vrot.slane %v250, %v469
    %vm472 = vcmask 523264
    %v474 = vsel %vm472, %v465, 0
    %476 = vmatprep.subr.mxu0 0.0
    %477 = vmatpush1.msra.mxu0 0.0
    %478 = vmatprep.subr.mxu0 0.0
    %479 = vmatpush1.msra.mxu0 0.0
    %480 = vmatprep.subr.mxu0 0.0
    %481 = vmatpush1.msra.mxu0 0.0
    %482 = vmatprep.subr.mxu0 0.0
    %483 = vmatpush1.msra.mxu0 0.0
    %484 = vmatprep.subr.mxu0 0.0
    %485 = vmatpush1.msra.mxu0 0.0
    %486 = vmatprep.subr.mxu0 0.0
    %487 = vmatpush1.msra.mxu0 0.0
    %488 = vmatprep.subr.mxu0 0.0
    %489 = vmatpush1.msra.mxu0 0.0
    %490 = vmatprep.subr.mxu0 0.0
    %491 = vmatpush1.msra.mxu0 0.0
    %492 = vmatprep.subr.mxu0 0.0
    %493 = vmatpush1.msra.mxu0 %v249
    %494 = vmatprep.subr.mxu0 0.0
    %495 = vmatpush1.msra.mxu0 %v248
    %496 = vmatprep.subr.mxu0 0.0
    %497 = vmatpush1.msra.mxu0 %v247
    %498 = vmatprep.subr.mxu0 0.0
    %499 = vmatpush1.msra.mxu0 %v246
    %500 = vmatprep.subr.mxu0 0.0
    %501 = vmatpush1.msra.mxu0 %v245
    %502 = vmatprep.subr.mxu0 0.0
    %503 = vmatpush1.msra.mxu0 %v244
    %504 = vmatprep.subr.mxu0 0.0
    %505 = vmatpush1.msra.mxu0 %v243
    %506 = vmatprep.subr.mxu0 0.0
    %507 = vmatpush1.msra.mxu0 %v242
    %508 = vmatprep.subr.mxu0 0.0
    %509 = vmatpush2.msra.mxu0 0.0
    %510 = vmatprep.subr.mxu0 0.0
    %511 = vmatpush2.msra.mxu0 0.0
    %512 = vmatprep.subr.mxu0 0.0
    %513 = vmatpush2.msra.mxu0 0.0
    %514 = vmatprep.subr.mxu0 0.0
    %515 = vmatpush2.msra.mxu0 0.0
    %516 = vmatprep.subr.mxu0 0.0
    %517 = vmatpush2.msra.mxu0 0.0
    %518 = vmatprep.subr.mxu0 0.0
    %519 = vmatpush2.msra.mxu0 0.0
    %520 = vmatprep.subr.mxu0 0.0
    %521 = vmatpush2.msra.mxu0 0.0
    %522 = vmatprep.subr.mxu0 0.0
    %523 = vmatpush2.msra.mxu0 0.0
    %524 = vmatprep.subr.mxu0 0.0
    %525 = vmatpush2.msra.mxu0 0.0
    %526 = vmatprep.subr.mxu0 0.0
    %527 = vmatpush2.msra.mxu0 0.0
    %528 = vmatprep.subr.mxu0 0.0
    %529 = vmatpush2.msra.mxu0 0.0
    %530 = vmatprep.subr.mxu0 0.0
    %531 = vmatpush2.msra.mxu0 0.0
    %532 = vmatprep.subr.mxu0 0.0
    %533 = vmatpush2.msra.mxu0 0.0
    %534 = vmatprep.subr.mxu0 0.0
    %535 = vmatpush2.msra.mxu0 0.0
    %536 = vmatprep.subr.mxu0 0.0
    %537 = vmatpush2.msra.mxu0 0.0
    %538 = vmatprep.subr.mxu0 0.0
    %539 = vmatpush2.msra.mxu0 0.0
    %540 = vmatprep.mubr.f32.mxu0 0.0
    %541 = vmatmul.mubr.f32.gmra.mxu0 %v474
    %v542 = vpop.f32.mrf.mxu0
    %v543 = vadd.f32 %v470, %v542
    %v544 = vpop.f32.mrf.mxu0
    %545 = vdwg.mxu0
    %v546 = vxor.u32 %v543, 2147483648
    %v547 = vmul.f32 %v546, 1.442695
    %v548 = vpow.pop %v547
    %v549 = vadd.f32 %v548, 1.0
    %v550 = vrcp.pop %v549
    %v551 = vmul.f32 1.0, %v550
    %v552 = vmul.f32 %v551, 2.0
    %v553 = vsub.f32 %v552, 1.0
    %555 = vrot.lane.b32.xlu0 %v256, 32
    %v556 = vpop.permute.xlu0 %555
    %v558 = vmul.f32 %v551, %v556
    %560 = vrot.lane.b32.xlu0 %v553, 64
    %v561 = vpop.permute.xlu0 %560
    %v563 = vmul.f32 %v551, %v561
    %565 = vrot.lane.b32.xlu0 %v563, 32
    %v566 = vpop.permute.xlu0 %565
    %v568 = vadd.f32 %v558, %v566
    %v569 = vtanh.pop %v568
    %571 = vrot.lane.b32.xlu0 %v569, 64
    %v572 = vpop.permute.xlu0 %571
    %v574 = vmul.f32 %v551, %v572
    %576 = vrot.lane.b32.xlu0 %v459, 32
    %v577 = vpop.permute.xlu0 %576
    %v578 = vsel %vm257, %v577, 0
    %580 = vmatprep.subr.mxu0 0.0
    %581 = vmatpush1.msra.mxu0 0.0
    %582 = vmatprep.subr.mxu0 0.0
    %583 = vmatpush1.msra.mxu0 0.0
    %584 = vmatprep.subr.mxu0 0.0
    %585 = vmatpush1.msra.mxu0 0.0
    %586 = vmatprep.subr.mxu0 0.0
    %587 = vmatpush1.msra.mxu0 0.0
    %588 = vmatprep.subr.mxu0 0.0
    %589 = vmatpush1.msra.mxu0 0.0
    %590 = vmatprep.subr.mxu0 0.0
    %591 = vmatpush1.msra.mxu0 0.0
    %592 = vmatprep.subr.mxu0 0.0
    %593 = vmatpush1.msra.mxu0 0.0
    %594 = vmatprep.subr.mxu0 0.0
    %595 = vmatpush1.msra.mxu0 0.0
    %596 = vmatprep.subr.mxu0 0.0
    %597 = vmatpush1.msra.mxu0 0.0
    %598 = vmatprep.subr.mxu0 0.0
    %599 = vmatpush1.msra.mxu0 0.0
    %600 = vmatprep.subr.mxu0 0.0
    %601 = vmatpush1.msra.mxu0 0.0
    %602 = vmatprep.subr.mxu0 0.0
    %603 = vmatpush1.msra.mxu0 0.0
    %604 = vmatprep.subr.mxu0 0.0
    %605 = vmatpush1.msra.mxu0 %v241
    %606 = vmatprep.subr.mxu0 0.0
    %607 = vmatpush1.msra.mxu0 %v240
    %608 = vmatprep.subr.mxu0 0.0
    %609 = vmatpush1.msra.mxu0 %v239
    %610 = vmatprep.subr.mxu0 0.0
    %611 = vmatpush1.msra.mxu0 %v238
    %612 = vmatprep.subr.mxu0 0.0
    %613 = vmatpush2.msra.mxu0 0.0
    %614 = vmatprep.subr.mxu0 0.0
    %615 = vmatpush2.msra.mxu0 0.0
    %616 = vmatprep.subr.mxu0 0.0
    %617 = vmatpush2.msra.mxu0 0.0
    %618 = vmatprep.subr.mxu0 0.0
    %619 = vmatpush2.msra.mxu0 0.0
    %620 = vmatprep.subr.mxu0 0.0
    %621 = vmatpush2.msra.mxu0 0.0
    %622 = vmatprep.subr.mxu0 0.0
    %623 = vmatpush2.msra.mxu0 0.0
    %624 = vmatprep.subr.mxu0 0.0
    %625 = vmatpush2.msra.mxu0 0.0
    %626 = vmatprep.subr.mxu0 0.0
    %627 = vmatpush2.msra.mxu0 0.0
    %628 = vmatprep.subr.mxu0 0.0
    %629 = vmatpush2.msra.mxu0 0.0
    %630 = vmatprep.subr.mxu0 0.0
    %631 = vmatpush2.msra.mxu0 0.0
    %632 = vmatprep.subr.mxu0 0.0
    %633 = vmatpush2.msra.mxu0 0.0
    %634 = vmatprep.subr.mxu0 0.0
    %635 = vmatpush2.msra.mxu0 0.0
    %636 = vmatprep.subr.mxu0 0.0
    %637 = vmatpush2.msra.mxu0 0.0
    %638 = vmatprep.subr.mxu0 0.0
    %639 = vmatpush2.msra.mxu0 0.0
    %640 = vmatprep.subr.mxu0 0.0
    %641 = vmatpush2.msra.mxu0 0.0
    %642 = vmatprep.subr.mxu0 0.0
    %643 = vmatpush2.msra.mxu0 0.0
    %644 = vmatprep.mubr.f32.mxu0 0.0
    %645 = vmatmul.mubr.f32.gmra.mxu0 %v578
    %v646 = vpop.f32.mrf.mxu0
    %v647 = vadd.f32 %v210, %v646
    %v648 = vpop.f32.mrf.mxu0
    %649 = vdwg.mxu0
    %v650 = vxor.u32 %v647, 2147483648
    %v651 = vmul.f32 %v650, 1.442695
    %v652 = vpow.pop %v651
    %v653 = vadd.f32 %v652, 1.0
    %v654 = vrcp.pop %v653
    %v655 = vmul.f32 1.0, %v654
    %v656 = vmul.f32 %v655, 2.0
    %v657 = vsub.f32 %v656, 1.0
    %v658 = vmul.f32 %v655, %v453
    %660 = vrot.lane.b32.xlu0 %v657, 64
    %v661 = vpop.permute.xlu0 %660
    %v663 = vmul.f32 %v655, %v661
    %665 = vrot.lane.b32.xlu0 %v663, 32
    %v666 = vpop.permute.xlu0 %665
    %v668 = vadd.f32 %v658, %v666
    %v669 = vtanh.pop %v668
    %671 = vrot.lane.b32.xlu0 %v669, 64
    %v672 = vpop.permute.xlu0 %671
    %v674 = vmul.f32 %v655, %v672
    %677 = vrot.lane.b32.xlu0 %v574, 64
    %v678 = vpop.permute.xlu0 %677
    %v680 = vsel %vm257, %v577, %v678
    %v682 = vsel %vm472, %v680, 0
    %684 = vmatprep.subr.mxu0 0.0
    %685 = vmatpush1.msra.mxu0 0.0
    %686 = vmatprep.subr.mxu0 0.0
    %687 = vmatpush1.msra.mxu0 0.0
    %688 = vmatprep.subr.mxu0 0.0
    %689 = vmatpush1.msra.mxu0 0.0
    %690 = vmatprep.subr.mxu0 0.0
    %691 = vmatpush1.msra.mxu0 0.0
    %692 = vmatprep.subr.mxu0 0.0
    %693 = vmatpush1.msra.mxu0 0.0
    %694 = vmatprep.subr.mxu0 0.0
    %695 = vmatpush1.msra.mxu0 0.0
    %696 = vmatprep.subr.mxu0 0.0
    %697 = vmatpush1.msra.mxu0 0.0
    %698 = vmatprep.subr.mxu0 0.0
    %699 = vmatpush1.msra.mxu0 0.0
    %700 = vmatprep.subr.mxu0 0.0
    %701 = vmatpush1.msra.mxu0 %v249
    %702 = vmatprep.subr.mxu0 0.0
    %703 = vmatpush1.msra.mxu0 %v248
    %704 = vmatprep.subr.mxu0 0.0
    %705 = vmatpush1.msra.mxu0 %v247
    %706 = vmatprep.subr.mxu0 0.0
    %707 = vmatpush1.msra.mxu0 %v246
    %708 = vmatprep.subr.mxu0 0.0
    %709 = vmatpush1.msra.mxu0 %v245
    %710 = vmatprep.subr.mxu0 0.0
    %711 = vmatpush1.msra.mxu0 %v244
    %712 = vmatprep.subr.mxu0 0.0
    %713 = vmatpush1.msra.mxu0 %v243
    %714 = vmatprep.subr.mxu0 0.0
    %715 = vmatpush1.msra.mxu0 %v242
    %716 = vmatprep.subr.mxu0 0.0
    %717 = vmatpush2.msra.mxu0 0.0
    %718 = vmatprep.subr.mxu0 0.0
    %719 = vmatpush2.msra.mxu0 0.0
    %720 = vmatprep.subr.mxu0 0.0
    %721 = vmatpush2.msra.mxu0 0.0
    %722 = vmatprep.subr.mxu0 0.0
    %723 = vmatpush2.msra.mxu0 0.0
    %724 = vmatprep.subr.mxu0 0.0
    %725 = vmatpush2.msra.mxu0 0.0
    %726 = vmatprep.subr.mxu0 0.0
    %727 = vmatpush2.msra.mxu0 0.0
    %728 = vmatprep.subr.mxu0 0.0
    %729 = vmatpush2.msra.mxu0 0.0
    %730 = vmatprep.subr.mxu0 0.0
    %731 = vmatpush2.msra.mxu0 0.0
    %732 = vmatprep.subr.mxu0 0.0
    %733 = vmatpush2.msra.mxu0 0.0
    %734 = vmatprep.subr.mxu0 0.0
    %735 = vmatpush2.msra.mxu0 0.0
    %736 = vmatprep.subr.mxu0 0.0
    %737 = vmatpush2.msra.mxu0 0.0
    %738 = vmatprep.subr.mxu0 0.0
    %739 = vmatpush2.msra.mxu0 0.0
    %740 = vmatprep.subr.mxu0 0.0
    %741 = vmatpush2.msra.mxu0 0.0
    %742 = vmatprep.subr.mxu0 0.0
    %743 = vmatpush2.msra.mxu0 0.0
    %744 = vmatprep.subr.mxu0 0.0
    %745 = vmatpush2.msra.mxu0 0.0
    %746 = vmatprep.subr.mxu0 0.0
    %747 = vmatpush2.msra.mxu0 0.0
    %748 = vmatprep.mubr.f32.mxu0 0.0
    %749 = vmatmul.mubr.f32.gmra.mxu0 %v682
    %v750 = vpop.f32.mrf.mxu0
    %v751 = vadd.f32 %v470, %v750
    %v752 = vpop.f32.mrf.mxu0
    %753 = vdwg.mxu0
    %v754 = vxor.u32 %v751, 2147483648
    %v755 = vmul.f32 %v754, 1.442695
    %v756 = vpow.pop %v755
    %v757 = vadd.f32 %v756, 1.0
    %v758 = vrcp.pop %v757
    %v759 = vmul.f32 1.0, %v758
    %v760 = vmul.f32 %v759, 2.0
    %v761 = vsub.f32 %v760, 1.0
    %v762 = vmul.f32 %v759, %v568
    %764 = vrot.lane.b32.xlu0 %v761, 64
    %v765 = vpop.permute.xlu0 %764
    %v767 = vmul.f32 %v759, %v765
    %769 = vrot.lane.b32.xlu0 %v767, 32
    %v770 = vpop.permute.xlu0 %769
    %v772 = vadd.f32 %v762, %v770
    %v773 = vtanh.pop %v772
    %775 = vrot.lane.b32.xlu0 %v773, 64
    %v776 = vpop.permute.xlu0 %775
    %v778 = vmul.f32 %v759, %v776
    %780 = vrot.lane.b32.xlu0 %v674, 32
    %v781 = vpop.permute.xlu0 %780
    %v782 = vsel %vm257, %v781, 0
    %784 = vmatprep.subr.mxu0 0.0
    %785 = vmatpush1.msra.mxu0 0.0
    %786 = vmatprep.subr.mxu0 0.0
    %787 = vmatpush1.msra.mxu0 0.0
    %788 = vmatprep.subr.mxu0 0.0
    %789 = vmatpush1.msra.mxu0 0.0
    %790 = vmatprep.subr.mxu0 0.0
    %791 = vmatpush1.msra.mxu0 0.0
    %792 = vmatprep.subr.mxu0 0.0
    %793 = vmatpush1.msra.mxu0 0.0
    %794 = vmatprep.subr.mxu0 0.0
    %795 = vmatpush1.msra.mxu0 0.0
    %796 = vmatprep.subr.mxu0 0.0
    %797 = vmatpush1.msra.mxu0 0.0
    %798 = vmatprep.subr.mxu0 0.0
    %799 = vmatpush1.msra.mxu0 0.0
    %800 = vmatprep.subr.mxu0 0.0
    %801 = vmatpush1.msra.mxu0 0.0
    %802 = vmatprep.subr.mxu0 0.0
    %803 = vmatpush1.msra.mxu0 0.0
    %804 = vmatprep.subr.mxu0 0.0
    %805 = vmatpush1.msra.mxu0 0.0
    %806 = vmatprep.subr.mxu0 0.0
    %807 = vmatpush1.msra.mxu0 0.0
    %808 = vmatprep.subr.mxu0 0.0
    %809 = vmatpush1.msra.mxu0 %v241
    %810 = vmatprep.subr.mxu0 0.0
    %811 = vmatpush1.msra.mxu0 %v240
    %812 = vmatprep.subr.mxu0 0.0
    %813 = vmatpush1.msra.mxu0 %v239
    %814 = vmatprep.subr.mxu0 0.0
    %815 = vmatpush1.msra.mxu0 %v238
    %816 = vmatprep.subr.mxu0 0.0
    %817 = vmatpush2.msra.mxu0 0.0
    %818 = vmatprep.subr.mxu0 0.0
    %819 = vmatpush2.msra.mxu0 0.0
    %820 = vmatprep.subr.mxu0 0.0
    %821 = vmatpush2.msra.mxu0 0.0
    %822 = vmatprep.subr.mxu0 0.0
    %823 = vmatpush2.msra.mxu0 0.0
    %824 = vmatprep.subr.mxu0 0.0
    %825 = vmatpush2.msra.mxu0 0.0
    %826 = vmatprep.subr.mxu0 0.0
    %827 = vmatpush2.msra.mxu0 0.0
    %828 = vmatprep.subr.mxu0 0.0
    %829 = vmatpush2.msra.mxu0 0.0
    %830 = vmatprep.subr.mxu0 0.0
    %831 = vmatpush2.msra.mxu0 0.0
    %832 = vmatprep.subr.mxu0 0.0
    %833 = vmatpush2.msra.mxu0 0.0
    %834 = vmatprep.subr.mxu0 0.0
    %835 = vmatpush2.msra.mxu0 0.0
    %836 = vmatprep.subr.mxu0 0.0
    %837 = vmatpush2.msra.mxu0 0.0
    %838 = vmatprep.subr.mxu0 0.0
    %839 = vmatpush2.msra.mxu0 0.0
    %840 = vmatprep.subr.mxu0 0.0
    %841 = vmatpush2.msra.mxu0 0.0
    %842 = vmatprep.subr.mxu0 0.0
    %843 = vmatpush2.msra.mxu0 0.0
    %844 = vmatprep.subr.mxu0 0.0
    %845 = vmatpush2.msra.mxu0 0.0
    %846 = vmatprep.subr.mxu0 0.0
    %847 = vmatpush2.msra.mxu0 0.0
    %848 = vmatprep.mubr.f32.mxu0 0.0
    %849 = vmatmul.mubr.f32.gmra.mxu0 %v782
    %v850 = vpop.f32.mrf.mxu0
    %v851 = vadd.f32 %v215, %v850
    %v852 = vpop.f32.mrf.mxu0
    %853 = vdwg.mxu0
    %v854 = vxor.u32 %v851, 2147483648
    %v855 = vmul.f32 %v854, 1.442695
    %v856 = vpow.pop %v855
    %v857 = vadd.f32 %v856, 1.0
    %v858 = vrcp.pop %v857
    %v859 = vmul.f32 1.0, %v858
    %v860 = vmul.f32 %v859, 2.0
    %v861 = vsub.f32 %v860, 1.0
    %v862 = vmul.f32 %v859, %v668
    %864 = vrot.lane.b32.xlu0 %v861, 64
    %v865 = vpop.permute.xlu0 %864
    %v867 = vmul.f32 %v859, %v865
    %869 = vrot.lane.b32.xlu0 %v867, 32
    %v870 = vpop.permute.xlu0 %869
    %v872 = vadd.f32 %v862, %v870
    %v873 = vtanh.pop %v872
    %875 = vrot.lane.b32.xlu0 %v873, 64
    %v876 = vpop.permute.xlu0 %875
    %v878 = vmul.f32 %v859, %v876
    %881 = vrot.lane.b32.xlu0 %v778, 64
    %v882 = vpop.permute.xlu0 %881
    %v884 = vsel %vm257, %v781, %v882
    %v886 = vsel %vm472, %v884, 0
    %888 = vmatprep.subr.mxu0 0.0
    %889 = vmatpush1.msra.mxu0 0.0
    %890 = vmatprep.subr.mxu0 0.0
    %891 = vmatpush1.msra.mxu0 0.0
    %892 = vmatprep.subr.mxu0 0.0
    %893 = vmatpush1.msra.mxu0 0.0
    %894 = vmatprep.subr.mxu0 0.0
    %895 = vmatpush1.msra.mxu0 0.0
    %896 = vmatprep.subr.mxu0 0.0
    %897 = vmatpush1.msra.mxu0 0.0
    %898 = vmatprep.subr.mxu0 0.0
    %899 = vmatpush1.msra.mxu0 0.0
    %900 = vmatprep.subr.mxu0 0.0
    %901 = vmatpush1.msra.mxu0 0.0
    %902 = vmatprep.subr.mxu0 0.0
    %903 = vmatpush1.msra.mxu0 0.0
    %904 = vmatprep.subr.mxu0 0.0
    %905 = vmatpush1.msra.mxu0 %v249
    %906 = vmatprep.subr.mxu0 0.0
    %907 = vmatpush1.msra.mxu0 %v248
    %908 = vmatprep.subr.mxu0 0.0
    %909 = vmatpush1.msra.mxu0 %v247
    %910 = vmatprep.subr.mxu0 0.0
    %911 = vmatpush1.msra.mxu0 %v246
    %912 = vmatprep.subr.mxu0 0.0
    %913 = vmatpush1.msra.mxu0 %v245
    %914 = vmatprep.subr.mxu0 0.0
    %915 = vmatpush1.msra.mxu0 %v244
    %916 = vmatprep.subr.mxu0 0.0
    %917 = vmatpush1.msra.mxu0 %v243
    %918 = vmatprep.subr.mxu0 0.0
    %919 = vmatpush1.msra.mxu0 %v242
    %920 = vmatprep.subr.mxu0 0.0
    %921 = vmatpush2.msra.mxu0 0.0
    %922 = vmatprep.subr.mxu0 0.0
    %923 = vmatpush2.msra.mxu0 0.0
    %924 = vmatprep.subr.mxu0 0.0
    %925 = vmatpush2.msra.mxu0 0.0
    %926 = vmatprep.subr.mxu0 0.0
    %927 = vmatpush2.msra.mxu0 0.0
    %928 = vmatprep.subr.mxu0 0.0
    %929 = vmatpush2.msra.mxu0 0.0
    %930 = vmatprep.subr.mxu0 0.0
    %931 = vmatpush2.msra.mxu0 0.0
    %932 = vmatprep.subr.mxu0 0.0
    %933 = vmatpush2.msra.mxu0 0.0
    %934 = vmatprep.subr.mxu0 0.0
    %935 = vmatpush2.msra.mxu0 0.0
    %936 = vmatprep.subr.mxu0 0.0
    %937 = vmatpush2.msra.mxu0 0.0
    %938 = vmatprep.subr.mxu0 0.0
    %939 = vmatpush2.msra.mxu0 0.0
    %940 = vmatprep.subr.mxu0 0.0
    %941 = vmatpush2.msra.mxu0 0.0
    %942 = vmatprep.subr.mxu0 0.0
    %943 = vmatpush2.msra.mxu0 0.0
    %944 = vmatprep.subr.mxu0 0.0
    %945 = vmatpush2.msra.mxu0 0.0
    %946 = vmatprep.subr.mxu0 0.0
    %947 = vmatpush2.msra.mxu0 0.0
    %948 = vmatprep.subr.mxu0 0.0
    %949 = vmatpush2.msra.mxu0 0.0
    %950 = vmatprep.subr.mxu0 0.0
    %951 = vmatpush2.msra.mxu0 0.0
    %952 = vmatprep.mubr.f32.mxu0 0.0
    %953 = vmatmul.mubr.f32.gmra.mxu0 %v886
    %v954 = vpop.f32.mrf.mxu0
    %v955 = vadd.f32 %v470, %v954
    %v956 = vpop.f32.mrf.mxu0
    %957 = vdwg.mxu0
    %v958 = vxor.u32 %v955, 2147483648
    %v959 = vmul.f32 %v958, 1.442695
    %v960 = vpow.pop %v959
    %v961 = vadd.f32 %v960, 1.0
    %v962 = vrcp.pop %v961
    %v963 = vmul.f32 1.0, %v962
    %v964 = vmul.f32 %v963, 2.0
    %v965 = vsub.f32 %v964, 1.0
    %v966 = vmul.f32 %v963, %v772
    %968 = vrot.lane.b32.xlu0 %v965, 64
    %v969 = vpop.permute.xlu0 %968
    %v971 = vmul.f32 %v963, %v969
    %973 = vrot.lane.b32.xlu0 %v971, 32
    %v974 = vpop.permute.xlu0 %973
    %v976 = vadd.f32 %v966, %v974
    %v977 = vtanh.pop %v976
    %979 = vrot.lane.b32.xlu0 %v977, 64
    %v980 = vpop.permute.xlu0 %979
    %v982 = vmul.f32 %v963, %v980
    %984 = vrot.lane.b32.xlu0 %v878, 32
    %v985 = vpop.permute.xlu0 %984
    %v986 = vsel %vm257, %v985, 0
    %988 = vmatprep.subr.mxu0 0.0
    %989 = vmatpush1.msra.mxu0 0.0
    %990 = vmatprep.subr.mxu0 0.0
    %991 = vmatpush1.msra.mxu0 0.0
    %992 = vmatprep.subr.mxu0 0.0
    %993 = vmatpush1.msra.mxu0 0.0
    %994 = vmatprep.subr.mxu0 0.0
    %995 = vmatpush1.msra.mxu0 0.0
    %996 = vmatprep.subr.mxu0 0.0
    %997 = vmatpush1.msra.mxu0 0.0
    %998 = vmatprep.subr.mxu0 0.0
    %999 = vmatpush1.msra.mxu0 0.0
    %1000 = vmatprep.subr.mxu0 0.0
    %1001 = vmatpush1.msra.mxu0 0.0
    %1002 = vmatprep.subr.mxu0 0.0
    %1003 = vmatpush1.msra.mxu0 0.0
    %1004 = vmatprep.subr.mxu0 0.0
    %1005 = vmatpush1.msra.mxu0 0.0
    %1006 = vmatprep.subr.mxu0 0.0
    %1007 = vmatpush1.msra.mxu0 0.0
    %1008 = vmatprep.subr.mxu0 0.0
    %1009 = vmatpush1.msra.mxu0 0.0
    %1010 = vmatprep.subr.mxu0 0.0
    %1011 = vmatpush1.msra.mxu0 0.0
    %1012 = vmatprep.subr.mxu0 0.0
    %1013 = vmatpush1.msra.mxu0 %v241
    %1014 = vmatprep.subr.mxu0 0.0
    %1015 = vmatpush1.msra.mxu0 %v240
    %1016 = vmatprep.subr.mxu0 0.0
    %1017 = vmatpush1.msra.mxu0 %v239
    %1018 = vmatprep.subr.mxu0 0.0
    %1019 = vmatpush1.msra.mxu0 %v238
    %1020 = vmatprep.subr.mxu0 0.0
    %1021 = vmatpush2.msra.mxu0 0.0
    %1022 = vmatprep.subr.mxu0 0.0
    %1023 = vmatpush2.msra.mxu0 0.0
    %1024 = vmatprep.subr.mxu0 0.0
    %1025 = vmatpush2.msra.mxu0 0.0
    %1026 = vmatprep.subr.mxu0 0.0
    %1027 = vmatpush2.msra.mxu0 0.0
    %1028 = vmatprep.subr.mxu0 0.0
    %1029 = vmatpush2.msra.mxu0 0.0
    %1030 = vmatprep.subr.mxu0 0.0
    %1031 = vmatpush2.msra.mxu0 0.0
    %1032 = vmatprep.subr.mxu0 0.0
    %1033 = vmatpush2.msra.mxu0 0.0
    %1034 = vmatprep.subr.mxu0 0.0
    %1035 = vmatpush2.msra.mxu0 0.0
    %1036 = vmatprep.subr.mxu0 0.0
    %1037 = vmatpush2.msra.mxu0 0.0
    %1038 = vmatprep.subr.mxu0 0.0
    %1039 = vmatpush2.msra.mxu0 0.0
    %1040 = vmatprep.subr.mxu0 0.0
    %1041 = vmatpush2.msra.mxu0 0.0
    %1042 = vmatprep.subr.mxu0 0.0
    %1043 = vmatpush2.msra.mxu0 0.0
    %1044 = vmatprep.subr.mxu0 0.0
    %1045 = vmatpush2.msra.mxu0 0.0
    %1046 = vmatprep.subr.mxu0 0.0
    %1047 = vmatpush2.msra.mxu0 0.0
    %1048 = vmatprep.subr.mxu0 0.0
    %1049 = vmatpush2.msra.mxu0 0.0
    %1050 = vmatprep.subr.mxu0 0.0
    %1051 = vmatpush2.msra.mxu0 0.0
    %1052 = vmatprep.mubr.f32.mxu0 0.0
    %1053 = vmatmul.mubr.f32.gmra.mxu0 %v986
    %v1054 = vpop.f32.mrf.mxu0
    %v1055 = vadd.f32 %v220, %v1054
    %v1056 = vpop.f32.mrf.mxu0
    %1057 = vdwg.mxu0
    %v1058 = vxor.u32 %v1055, 2147483648
    %v1059 = vmul.f32 %v1058, 1.442695
    %v1060 = vpow.pop %v1059
    %v1061 = vadd.f32 %v1060, 1.0
    %v1062 = vrcp.pop %v1061
    %v1063 = vmul.f32 1.0, %v1062
    %v1064 = vmul.f32 %v1063, 2.0
    %v1065 = vsub.f32 %v1064, 1.0
    %v1066 = vmul.f32 %v1063, %v872
    %1068 = vrot.lane.b32.xlu0 %v1065, 64
    %v1069 = vpop.permute.xlu0 %1068
    %v1071 = vmul.f32 %v1063, %v1069
    %1073 = vrot.lane.b32.xlu0 %v1071, 32
    %v1074 = vpop.permute.xlu0 %1073
    %v1076 = vadd.f32 %v1066, %v1074
    %v1077 = vtanh.pop %v1076
    %1079 = vrot.lane.b32.xlu0 %v1077, 64
    %v1080 = vpop.permute.xlu0 %1079
    %v1082 = vmul.f32 %v1063, %v1080
    %1085 = vrot.lane.b32.xlu0 %v982, 64
    %v1086 = vpop.permute.xlu0 %1085
    %v1088 = vsel %vm257, %v985, %v1086
    %v1090 = vsel %vm472, %v1088, 0
    %1092 = vmatprep.subr.mxu0 0.0
    %1093 = vmatpush1.msra.mxu0 0.0
    %1094 = vmatprep.subr.mxu0 0.0
    %1095 = vmatpush1.msra.mxu0 0.0
    %1096 = vmatprep.subr.mxu0 0.0
    %1097 = vmatpush1.msra.mxu0 0.0
    %1098 = vmatprep.subr.mxu0 0.0
    %1099 = vmatpush1.msra.mxu0 0.0
    %1100 = vmatprep.subr.mxu0 0.0
    %1101 = vmatpush1.msra.mxu0 0.0
    %1102 = vmatprep.subr.mxu0 0.0
    %1103 = vmatpush1.msra.mxu0 0.0
    %1104 = vmatprep.subr.mxu0 0.0
    %1105 = vmatpush1.msra.mxu0 0.0
    %1106 = vmatprep.subr.mxu0 0.0
    %1107 = vmatpush1.msra.mxu0 0.0
    %1108 = vmatprep.subr.mxu0 0.0
    %1109 = vmatpush1.msra.mxu0 %v249
    %1110 = vmatprep.subr.mxu0 0.0
    %1111 = vmatpush1.msra.mxu0 %v248
    %1112 = vmatprep.subr.mxu0 0.0
    %1113 = vmatpush1.msra.mxu0 %v247
    %1114 = vmatprep.subr.mxu0 0.0
    %1115 = vmatpush1.msra.mxu0 %v246
    %1116 = vmatprep.subr.mxu0 0.0
    %1117 = vmatpush1.msra.mxu0 %v245
    %1118 = vmatprep.subr.mxu0 0.0
    %1119 = vmatpush1.msra.mxu0 %v244
    %1120 = vmatprep.subr.mxu0 0.0
    %1121 = vmatpush1.msra.mxu0 %v243
    %1122 = vmatprep.subr.mxu0 0.0
    %1123 = vmatpush1.msra.mxu0 %v242
    %1124 = vmatprep.subr.mxu0 0.0
    %1125 = vmatpush2.msra.mxu0 0.0
    %1126 = vmatprep.subr.mxu0 0.0
    %1127 = vmatpush2.msra.mxu0 0.0
    %1128 = vmatprep.subr.mxu0 0.0
    %1129 = vmatpush2.msra.mxu0 0.0
    %1130 = vmatprep.subr.mxu0 0.0
    %1131 = vmatpush2.msra.mxu0 0.0
    %1132 = vmatprep.subr.mxu0 0.0
    %1133 = vmatpush2.msra.mxu0 0.0
    %1134 = vmatprep.subr.mxu0 0.0
    %1135 = vmatpush2.msra.mxu0 0.0
    %1136 = vmatprep.subr.mxu0 0.0
    %1137 = vmatpush2.msra.mxu0 0.0
    %1138 = vmatprep.subr.mxu0 0.0
    %1139 = vmatpush2.msra.mxu0 0.0
    %1140 = vmatprep.subr.mxu0 0.0
    %1141 = vmatpush2.msra.mxu0 0.0
    %1142 = vmatprep.subr.mxu0 0.0
    %1143 = vmatpush2.msra.mxu0 0.0
    %1144 = vmatprep.subr.mxu0 0.0
    %1145 = vmatpush2.msra.mxu0 0.0
    %1146 = vmatprep.subr.mxu0 0.0
    %1147 = vmatpush2.msra.mxu0 0.0
    %1148 = vmatprep.subr.mxu0 0.0
    %1149 = vmatpush2.msra.mxu0 0.0
    %1150 = vmatprep.subr.mxu0 0.0
    %1151 = vmatpush2.msra.mxu0 0.0
    %1152 = vmatprep.subr.mxu0 0.0
    %1153 = vmatpush2.msra.mxu0 0.0
    %1154 = vmatprep.subr.mxu0 0.0
    %1155 = vmatpush2.msra.mxu0 0.0
    %1156 = vmatprep.mubr.f32.mxu0 0.0
    %1157 = vmatmul.mubr.f32.gmra.mxu0 %v1090
    %v1158 = vpop.f32.mrf.mxu0
    %v1159 = vadd.f32 %v470, %v1158
    %v1160 = vpop.f32.mrf.mxu0
    %1161 = vdwg.mxu0
    %v1162 = vxor.u32 %v1159, 2147483648
    %v1163 = vmul.f32 %v1162, 1.442695
    %v1164 = vpow.pop %v1163
    %v1165 = vadd.f32 %v1164, 1.0
    %v1166 = vrcp.pop %v1165
    %v1167 = vmul.f32 1.0, %v1166
    %v1168 = vmul.f32 %v1167, 2.0
    %v1169 = vsub.f32 %v1168, 1.0
    %v1170 = vmul.f32 %v1167, %v976
    %1172 = vrot.lane.b32.xlu0 %v1169, 64
    %v1173 = vpop.permute.xlu0 %1172
    %v1175 = vmul.f32 %v1167, %v1173
    %1177 = vrot.lane.b32.xlu0 %v1175, 32
    %v1178 = vpop.permute.xlu0 %1177
    %v1180 = vadd.f32 %v1170, %v1178
    %v1181 = vtanh.pop %v1180
    %1183 = vrot.lane.b32.xlu0 %v1181, 64
    %v1184 = vpop.permute.xlu0 %1183
    %v1186 = vmul.f32 %v1167, %v1184
    %1188 = vrot.lane.b32.xlu0 %v1082, 32
    %v1189 = vpop.permute.xlu0 %1188
    %v1190 = vsel %vm257, %v1189, 0
    %1192 = vmatprep.subr.mxu0 0.0
    %1193 = vmatpush1.msra.mxu0 0.0
    %1194 = vmatprep.subr.mxu0 0.0
    %1195 = vmatpush1.msra.mxu0 0.0
    %1196 = vmatprep.subr.mxu0 0.0
    %1197 = vmatpush1.msra.mxu0 0.0
    %1198 = vmatprep.subr.mxu0 0.0
    %1199 = vmatpush1.msra.mxu0 0.0
    %1200 = vmatprep.subr.mxu0 0.0
    %1201 = vmatpush1.msra.mxu0 0.0
    %1202 = vmatprep.subr.mxu0 0.0
    %1203 = vmatpush1.msra.mxu0 0.0
    %1204 = vmatprep.subr.mxu0 0.0
    %1205 = vmatpush1.msra.mxu0 0.0
    %1206 = vmatprep.subr.mxu0 0.0
    %1207 = vmatpush1.msra.mxu0 0.0
    %1208 = vmatprep.subr.mxu0 0.0
    %1209 = vmatpush1.msra.mxu0 0.0
    %1210 = vmatprep.subr.mxu0 0.0
    %1211 = vmatpush1.msra.mxu0 0.0
    %1212 = vmatprep.subr.mxu0 0.0
    %1213 = vmatpush1.msra.mxu0 0.0
    %1214 = vmatprep.subr.mxu0 0.0
    %1215 = vmatpush1.msra.mxu0 0.0
    %1216 = vmatprep.subr.mxu0 0.0
    %1217 = vmatpush1.msra.mxu0 %v241
    %1218 = vmatprep.subr.mxu0 0.0
    %1219 = vmatpush1.msra.mxu0 %v240
    %1220 = vmatprep.subr.mxu0 0.0
    %1221 = vmatpush1.msra.mxu0 %v239
    %1222 = vmatprep.subr.mxu0 0.0
    %1223 = vmatpush1.msra.mxu0 %v238
    %1224 = vmatprep.subr.mxu0 0.0
    %1225 = vmatpush2.msra.mxu0 0.0
    %1226 = vmatprep.subr.mxu0 0.0
    %1227 = vmatpush2.msra.mxu0 0.0
    %1228 = vmatprep.subr.mxu0 0.0
    %1229 = vmatpush2.msra.mxu0 0.0
    %1230 = vmatprep.subr.mxu0 0.0
    %1231 = vmatpush2.msra.mxu0 0.0
    %1232 = vmatprep.subr.mxu0 0.0
    %1233 = vmatpush2.msra.mxu0 0.0
    %1234 = vmatprep.subr.mxu0 0.0
    %1235 = vmatpush2.msra.mxu0 0.0
    %1236 = vmatprep.subr.mxu0 0.0
    %1237 = vmatpush2.msra.mxu0 0.0
    %1238 = vmatprep.subr.mxu0 0.0
    %1239 = vmatpush2.msra.mxu0 0.0
    %1240 = vmatprep.subr.mxu0 0.0
    %1241 = vmatpush2.msra.mxu0 0.0
    %1242 = vmatprep.subr.mxu0 0.0
    %1243 = vmatpush2.msra.mxu0 0.0
    %1244 = vmatprep.subr.mxu0 0.0
    %1245 = vmatpush2.msra.mxu0 0.0
    %1246 = vmatprep.subr.mxu0 0.0
    %1247 = vmatpush2.msra.mxu0 0.0
    %1248 = vmatprep.subr.mxu0 0.0
    %1249 = vmatpush2.msra.mxu0 0.0
    %1250 = vmatprep.subr.mxu0 0.0
    %1251 = vmatpush2.msra.mxu0 0.0
    %1252 = vmatprep.subr.mxu0 0.0
    %1253 = vmatpush2.msra.mxu0 0.0
    %1254 = vmatprep.subr.mxu0 0.0
    %1255 = vmatpush2.msra.mxu0 0.0
    %1256 = vmatprep.mubr.f32.mxu0 0.0
    %1257 = vmatmul.mubr.f32.gmra.mxu0 %v1190
    %v1258 = vpop.f32.mrf.mxu0
    %v1259 = vadd.f32 %v225, %v1258
    %v1260 = vpop.f32.mrf.mxu0
    %1261 = vdwg.mxu0
    %v1262 = vxor.u32 %v1259, 2147483648
    %v1263 = vmul.f32 %v1262, 1.442695
    %v1264 = vpow.pop %v1263
    %v1265 = vadd.f32 %v1264, 1.0
    %v1266 = vrcp.pop %v1265
    %v1267 = vmul.f32 1.0, %v1266
    %v1268 = vmul.f32 %v1267, 2.0
    %v1269 = vsub.f32 %v1268, 1.0
    %v1270 = vmul.f32 %v1267, %v1076
    %1272 = vrot.lane.b32.xlu0 %v1269, 64
    %v1273 = vpop.permute.xlu0 %1272
    %v1275 = vmul.f32 %v1267, %v1273
    %1277 = vrot.lane.b32.xlu0 %v1275, 32
    %v1278 = vpop.permute.xlu0 %1277
    %v1280 = vadd.f32 %v1270, %v1278
    %v1281 = vtanh.pop %v1280
    %1283 = vrot.lane.b32.xlu0 %v1281, 64
    %v1284 = vpop.permute.xlu0 %1283
    %v1286 = vmul.f32 %v1267, %v1284
    %1289 = vrot.lane.b32.xlu0 %v1186, 64
    %v1290 = vpop.permute.xlu0 %1289
    %v1292 = vsel %vm257, %v1189, %v1290
    %v1294 = vsel %vm472, %v1292, 0
    %1296 = vmatprep.subr.mxu0 0.0
    %1297 = vmatpush1.msra.mxu0 0.0
    %1298 = vmatprep.subr.mxu0 0.0
    %1299 = vmatpush1.msra.mxu0 0.0
    %1300 = vmatprep.subr.mxu0 0.0
    %1301 = vmatpush1.msra.mxu0 0.0
    %1302 = vmatprep.subr.mxu0 0.0
    %1303 = vmatpush1.msra.mxu0 0.0
    %1304 = vmatprep.subr.mxu0 0.0
    %1305 = vmatpush1.msra.mxu0 0.0
    %1306 = vmatprep.subr.mxu0 0.0
    %1307 = vmatpush1.msra.mxu0 0.0
    %1308 = vmatprep.subr.mxu0 0.0
    %1309 = vmatpush1.msra.mxu0 0.0
    %1310 = vmatprep.subr.mxu0 0.0
    %1311 = vmatpush1.msra.mxu0 0.0
    %1312 = vmatprep.subr.mxu0 0.0
    %1313 = vmatpush1.msra.mxu0 %v249
    %1314 = vmatprep.subr.mxu0 0.0
    %1315 = vmatpush1.msra.mxu0 %v248
    %1316 = vmatprep.subr.mxu0 0.0
    %1317 = vmatpush1.msra.mxu0 %v247
    %1318 = vmatprep.subr.mxu0 0.0
    %1319 = vmatpush1.msra.mxu0 %v246
    %1320 = vmatprep.subr.mxu0 0.0
    %1321 = vmatpush1.msra.mxu0 %v245
    %1322 = vmatprep.subr.mxu0 0.0
    %1323 = vmatpush1.msra.mxu0 %v244
    %1324 = vmatprep.subr.mxu0 0.0
    %1325 = vmatpush1.msra.mxu0 %v243
    %1326 = vmatprep.subr.mxu0 0.0
    %1327 = vmatpush1.msra.mxu0 %v242
    %1328 = vmatprep.subr.mxu0 0.0
    %1329 = vmatpush2.msra.mxu0 0.0
    %1330 = vmatprep.subr.mxu0 0.0
    %1331 = vmatpush2.msra.mxu0 0.0
    %1332 = vmatprep.subr.mxu0 0.0
    %1333 = vmatpush2.msra.mxu0 0.0
    %1334 = vmatprep.subr.mxu0 0.0
    %1335 = vmatpush2.msra.mxu0 0.0
    %1336 = vmatprep.subr.mxu0 0.0
    %1337 = vmatpush2.msra.mxu0 0.0
    %1338 = vmatprep.subr.mxu0 0.0
    %1339 = vmatpush2.msra.mxu0 0.0
    %1340 = vmatprep.subr.mxu0 0.0
    %1341 = vmatpush2.msra.mxu0 0.0
    %1342 = vmatprep.subr.mxu0 0.0
    %1343 = vmatpush2.msra.mxu0 0.0
    %1344 = vmatprep.subr.mxu0 0.0
    %1345 = vmatpush2.msra.mxu0 0.0
    %1346 = vmatprep.subr.mxu0 0.0
    %1347 = vmatpush2.msra.mxu0 0.0
    %1348 = vmatprep.subr.mxu0 0.0
    %1349 = vmatpush2.msra.mxu0 0.0
    %1350 = vmatprep.subr.mxu0 0.0
    %1351 = vmatpush2.msra.mxu0 0.0
    %1352 = vmatprep.subr.mxu0 0.0
    %1353 = vmatpush2.msra.mxu0 0.0
    %1354 = vmatprep.subr.mxu0 0.0
    %1355 = vmatpush2.msra.mxu0 0.0
    %1356 = vmatprep.subr.mxu0 0.0
    %1357 = vmatpush2.msra.mxu0 0.0
    %1358 = vmatprep.subr.mxu0 0.0
    %1359 = vmatpush2.msra.mxu0 0.0
    %1360 = vmatprep.mubr.f32.mxu0 0.0
    %1361 = vmatmul.mubr.f32.gmra.mxu0 %v1294
    %v1362 = vpop.f32.mrf.mxu0
    %v1363 = vadd.f32 %v470, %v1362
    %v1364 = vpop.f32.mrf.mxu0
    %1365 = vdwg.mxu0
    %v1366 = vxor.u32 %v1363, 2147483648
    %v1367 = vmul.f32 %v1366, 1.442695
    %v1368 = vpow.pop %v1367
    %v1369 = vadd.f32 %v1368, 1.0
    %v1370 = vrcp.pop %v1369
    %v1371 = vmul.f32 1.0, %v1370
    %v1372 = vmul.f32 %v1371, 2.0
    %v1373 = vsub.f32 %v1372, 1.0
    %v1374 = vmul.f32 %v1371, %v1180
    %1376 = vrot.lane.b32.xlu0 %v1373, 64
    %v1377 = vpop.permute.xlu0 %1376
    %v1379 = vmul.f32 %v1371, %v1377
    %1381 = vrot.lane.b32.xlu0 %v1379, 32
    %v1382 = vpop.permute.xlu0 %1381
    %v1384 = vadd.f32 %v1374, %v1382
    %v1385 = vtanh.pop %v1384
    %1387 = vrot.lane.b32.xlu0 %v1385, 64
    %v1388 = vpop.permute.xlu0 %1387
    %v1390 = vmul.f32 %v1371, %v1388
    %1392 = vrot.lane.b32.xlu0 %v1286, 32
    %v1393 = vpop.permute.xlu0 %1392
    %v1394 = vsel %vm257, %v1393, 0
    %1396 = vmatprep.subr.mxu0 0.0
    %1397 = vmatpush1.msra.mxu0 0.0
    %1398 = vmatprep.subr.mxu0 0.0
    %1399 = vmatpush1.msra.mxu0 0.0
    %1400 = vmatprep.subr.mxu0 0.0
    %1401 = vmatpush1.msra.mxu0 0.0
    %1402 = vmatprep.subr.mxu0 0.0
    %1403 = vmatpush1.msra.mxu0 0.0
    %1404 = vmatprep.subr.mxu0 0.0
    %1405 = vmatpush1.msra.mxu0 0.0
    %1406 = vmatprep.subr.mxu0 0.0
    %1407 = vmatpush1.msra.mxu0 0.0
    %1408 = vmatprep.subr.mxu0 0.0
    %1409 = vmatpush1.msra.mxu0 0.0
    %1410 = vmatprep.subr.mxu0 0.0
    %1411 = vmatpush1.msra.mxu0 0.0
    %1412 = vmatprep.subr.mxu0 0.0
    %1413 = vmatpush1.msra.mxu0 0.0
    %1414 = vmatprep.subr.mxu0 0.0
    %1415 = vmatpush1.msra.mxu0 0.0
    %1416 = vmatprep.subr.mxu0 0.0
    %1417 = vmatpush1.msra.mxu0 0.0
    %1418 = vmatprep.subr.mxu0 0.0
    %1419 = vmatpush1.msra.mxu0 0.0
    %1420 = vmatprep.subr.mxu0 0.0
    %1421 = vmatpush1.msra.mxu0 %v241
    %1422 = vmatprep.subr.mxu0 0.0
    %1423 = vmatpush1.msra.mxu0 %v240
    %1424 = vmatprep.subr.mxu0 0.0
    %1425 = vmatpush1.msra.mxu0 %v239
    %1426 = vmatprep.subr.mxu0 0.0
    %1427 = vmatpush1.msra.mxu0 %v238
    %1428 = vmatprep.subr.mxu0 0.0
    %1429 = vmatpush2.msra.mxu0 0.0
    %1430 = vmatprep.subr.mxu0 0.0
    %1431 = vmatpush2.msra.mxu0 0.0
    %1432 = vmatprep.subr.mxu0 0.0
    %1433 = vmatpush2.msra.mxu0 0.0
    %1434 = vmatprep.subr.mxu0 0.0
    %1435 = vmatpush2.msra.mxu0 0.0
    %1436 = vmatprep.subr.mxu0 0.0
    %1437 = vmatpush2.msra.mxu0 0.0
    %1438 = vmatprep.subr.mxu0 0.0
    %1439 = vmatpush2.msra.mxu0 0.0
    %1440 = vmatprep.subr.mxu0 0.0
    %1441 = vmatpush2.msra.mxu0 0.0
    %1442 = vmatprep.subr.mxu0 0.0
    %1443 = vmatpush2.msra.mxu0 0.0
    %1444 = vmatprep.subr.mxu0 0.0
    %1445 = vmatpush2.msra.mxu0 0.0
    %1446 = vmatprep.subr.mxu0 0.0
    %1447 = vmatpush2.msra.mxu0 0.0
    %1448 = vmatprep.subr.mxu0 0.0
    %1449 = vmatpush2.msra.mxu0 0.0
    %1450 = vmatprep.subr.mxu0 0.0
    %1451 = vmatpush2.msra.mxu0 0.0
    %1452 = vmatprep.subr.mxu0 0.0
    %1453 = vmatpush2.msra.mxu0 0.0
    %1454 = vmatprep.subr.mxu0 0.0
    %1455 = vmatpush2.msra.mxu0 0.0
    %1456 = vmatprep.subr.mxu0 0.0
    %1457 = vmatpush2.msra.mxu0 0.0
    %1458 = vmatprep.subr.mxu0 0.0
    %1459 = vmatpush2.msra.mxu0 0.0
    %1460 = vmatprep.mubr.f32.mxu0 0.0
    %1461 = vmatmul.mubr.f32.gmra.mxu0 %v1394
    %v1462 = vpop.f32.mrf.mxu0
    %v1463 = vadd.f32 %v230, %v1462
    %v1464 = vpop.f32.mrf.mxu0
    %1465 = vdwg.mxu0
    %v1466 = vxor.u32 %v1463, 2147483648
    %v1467 = vmul.f32 %v1466, 1.442695
    %v1468 = vpow.pop %v1467
    %v1469 = vadd.f32 %v1468, 1.0
    %v1470 = vrcp.pop %v1469
    %v1471 = vmul.f32 1.0, %v1470
    %v1472 = vmul.f32 %v1471, 2.0
    %v1473 = vsub.f32 %v1472, 1.0
    %v1474 = vmul.f32 %v1471, %v1280
    %1476 = vrot.lane.b32.xlu0 %v1473, 64
    %v1477 = vpop.permute.xlu0 %1476
    %v1479 = vmul.f32 %v1471, %v1477
    %1481 = vrot.lane.b32.xlu0 %v1479, 32
    %v1482 = vpop.permute.xlu0 %1481
    %v1484 = vadd.f32 %v1474, %v1482
    %v1485 = vtanh.pop %v1484
    %1487 = vrot.lane.b32.xlu0 %v1485, 64
    %v1488 = vpop.permute.xlu0 %1487
    %v1490 = vmul.f32 %v1471, %v1488
    %1493 = vrot.lane.b32.xlu0 %v1390, 64
    %v1494 = vpop.permute.xlu0 %1493
    %v1496 = vsel %vm257, %v1393, %v1494
    %v1498 = vsel %vm472, %v1496, 0
    %1500 = vmatprep.subr.mxu0 0.0
    %1501 = vmatpush1.msra.mxu0 0.0
    %1502 = vmatprep.subr.mxu0 0.0
    %1503 = vmatpush1.msra.mxu0 0.0
    %1504 = vmatprep.subr.mxu0 0.0
    %1505 = vmatpush1.msra.mxu0 0.0
    %1506 = vmatprep.subr.mxu0 0.0
    %1507 = vmatpush1.msra.mxu0 0.0
    %1508 = vmatprep.subr.mxu0 0.0
    %1509 = vmatpush1.msra.mxu0 0.0
    %1510 = vmatprep.subr.mxu0 0.0
    %1511 = vmatpush1.msra.mxu0 0.0
    %1512 = vmatprep.subr.mxu0 0.0
    %1513 = vmatpush1.msra.mxu0 0.0
    %1514 = vmatprep.subr.mxu0 0.0
    %1515 = vmatpush1.msra.mxu0 0.0
    %1516 = vmatprep.subr.mxu0 0.0
    %1517 = vmatpush1.msra.mxu0 %v249
    %1518 = vmatprep.subr.mxu0 0.0
    %1519 = vmatpush1.msra.mxu0 %v248
    %1520 = vmatprep.subr.mxu0 0.0
    %1521 = vmatpush1.msra.mxu0 %v247
    %1522 = vmatprep.subr.mxu0 0.0
    %1523 = vmatpush1.msra.mxu0 %v246
    %1524 = vmatprep.subr.mxu0 0.0
    %1525 = vmatpush1.msra.mxu0 %v245
    %1526 = vmatprep.subr.mxu0 0.0
    %1527 = vmatpush1.msra.mxu0 %v244
    %1528 = vmatprep.subr.mxu0 0.0
    %1529 = vmatpush1.msra.mxu0 %v243
    %1530 = vmatprep.subr.mxu0 0.0
    %1531 = vmatpush1.msra.mxu0 %v242
    %1532 = vmatprep.subr.mxu0 0.0
    %1533 = vmatpush2.msra.mxu0 0.0
    %1534 = vmatprep.subr.mxu0 0.0
    %1535 = vmatpush2.msra.mxu0 0.0
    %1536 = vmatprep.subr.mxu0 0.0
    %1537 = vmatpush2.msra.mxu0 0.0
    %1538 = vmatprep.subr.mxu0 0.0
    %1539 = vmatpush2.msra.mxu0 0.0
    %1540 = vmatprep.subr.mxu0 0.0
    %1541 = vmatpush2.msra.mxu0 0.0
    %1542 = vmatprep.subr.mxu0 0.0
    %1543 = vmatpush2.msra.mxu0 0.0
    %1544 = vmatprep.subr.mxu0 0.0
    %1545 = vmatpush2.msra.mxu0 0.0
    %1546 = vmatprep.subr.mxu0 0.0
    %1547 = vmatpush2.msra.mxu0 0.0
    %1548 = vmatprep.subr.mxu0 0.0
    %1549 = vmatpush2.msra.mxu0 0.0
    %1550 = vmatprep.subr.mxu0 0.0
    %1551 = vmatpush2.msra.mxu0 0.0
    %1552 = vmatprep.subr.mxu0 0.0
    %1553 = vmatpush2.msra.mxu0 0.0
    %1554 = vmatprep.subr.mxu0 0.0
    %1555 = vmatpush2.msra.mxu0 0.0
    %1556 = vmatprep.subr.mxu0 0.0
    %1557 = vmatpush2.msra.mxu0 0.0
    %1558 = vmatprep.subr.mxu0 0.0
    %1559 = vmatpush2.msra.mxu0 0.0
    %1560 = vmatprep.subr.mxu0 0.0
    %1561 = vmatpush2.msra.mxu0 0.0
    %1562 = vmatprep.subr.mxu0 0.0
    %1563 = vmatpush2.msra.mxu0 0.0
    %1564 = vmatprep.mubr.f32.mxu0 0.0
    %1565 = vmatmul.mubr.f32.gmra.mxu0 %v1498
    %v1566 = vpop.f32.mrf.mxu0
    %v1567 = vadd.f32 %v470, %v1566
    %v1568 = vpop.f32.mrf.mxu0
    %1569 = vdwg.mxu0
    %v1570 = vxor.u32 %v1567, 2147483648
    %v1571 = vmul.f32 %v1570, 1.442695
    %v1572 = vpow.pop %v1571
    %v1573 = vadd.f32 %v1572, 1.0
    %v1574 = vrcp.pop %v1573
    %v1575 = vmul.f32 1.0, %v1574
    %v1576 = vmul.f32 %v1575, 2.0
    %v1577 = vsub.f32 %v1576, 1.0
    %v1578 = vmul.f32 %v1575, %v1384
    %1580 = vrot.lane.b32.xlu0 %v1577, 64
    %v1581 = vpop.permute.xlu0 %1580
    %v1583 = vmul.f32 %v1575, %v1581
    %1585 = vrot.lane.b32.xlu0 %v1583, 32
    %v1586 = vpop.permute.xlu0 %1585
    %v1588 = vadd.f32 %v1578, %v1586
    %v1589 = vtanh.pop %v1588
    %1591 = vrot.lane.b32.xlu0 %v1589, 64
    %v1592 = vpop.permute.xlu0 %1591
    %v1594 = vmul.f32 %v1575, %v1592
    %1596 = vrot.lane.b32.xlu0 %v1490, 32
    %v1597 = vpop.permute.xlu0 %1596
    %v1598 = vsel %vm257, %v1597, 0
    %1600 = vmatprep.subr.mxu0 0.0
    %1601 = vmatpush1.msra.mxu0 0.0
    %1602 = vmatprep.subr.mxu0 0.0
    %1603 = vmatpush1.msra.mxu0 0.0
    %1604 = vmatprep.subr.mxu0 0.0
    %1605 = vmatpush1.msra.mxu0 0.0
    %1606 = vmatprep.subr.mxu0 0.0
    %1607 = vmatpush1.msra.mxu0 0.0
    %1608 = vmatprep.subr.mxu0 0.0
    %1609 = vmatpush1.msra.mxu0 0.0
    %1610 = vmatprep.subr.mxu0 0.0
    %1611 = vmatpush1.msra.mxu0 0.0
    %1612 = vmatprep.subr.mxu0 0.0
    %1613 = vmatpush1.msra.mxu0 0.0
    %1614 = vmatprep.subr.mxu0 0.0
    %1615 = vmatpush1.msra.mxu0 0.0
    %1616 = vmatprep.subr.mxu0 0.0
    %1617 = vmatpush1.msra.mxu0 0.0
    %1618 = vmatprep.subr.mxu0 0.0
    %1619 = vmatpush1.msra.mxu0 0.0
    %1620 = vmatprep.subr.mxu0 0.0
    %1621 = vmatpush1.msra.mxu0 0.0
    %1622 = vmatprep.subr.mxu0 0.0
    %1623 = vmatpush1.msra.mxu0 0.0
    %1624 = vmatprep.subr.mxu0 0.0
    %1625 = vmatpush1.msra.mxu0 %v241
    %1626 = vmatprep.subr.mxu0 0.0
    %1627 = vmatpush1.msra.mxu0 %v240
    %1628 = vmatprep.subr.mxu0 0.0
    %1629 = vmatpush1.msra.mxu0 %v239
    %1630 = vmatprep.subr.mxu0 0.0
    %1631 = vmatpush1.msra.mxu0 %v238
    %1632 = vmatprep.subr.mxu0 0.0
    %1633 = vmatpush2.msra.mxu0 0.0
    %1634 = vmatprep.subr.mxu0 0.0
    %1635 = vmatpush2.msra.mxu0 0.0
    %1636 = vmatprep.subr.mxu0 0.0
    %1637 = vmatpush2.msra.mxu0 0.0
    %1638 = vmatprep.subr.mxu0 0.0
    %1639 = vmatpush2.msra.mxu0 0.0
    %1640 = vmatprep.subr.mxu0 0.0
    %1641 = vmatpush2.msra.mxu0 0.0
    %1642 = vmatprep.subr.mxu0 0.0
    %1643 = vmatpush2.msra.mxu0 0.0
    %1644 = vmatprep.subr.mxu0 0.0
    %1645 = vmatpush2.msra.mxu0 0.0
    %1646 = vmatprep.subr.mxu0 0.0
    %1647 = vmatpush2.msra.mxu0 0.0
    %1648 = vmatprep.subr.mxu0 0.0
    %1649 = vmatpush2.msra.mxu0 0.0
    %1650 = vmatprep.subr.mxu0 0.0
    %1651 = vmatpush2.msra.mxu0 0.0
    %1652 = vmatprep.subr.mxu0 0.0
    %1653 = vmatpush2.msra.mxu0 0.0
    %1654 = vmatprep.subr.mxu0 0.0
    %1655 = vmatpush2.msra.mxu0 0.0
    %1656 = vmatprep.subr.mxu0 0.0
    %1657 = vmatpush2.msra.mxu0 0.0
    %1658 = vmatprep.subr.mxu0 0.0
    %1659 = vmatpush2.msra.mxu0 0.0
    %1660 = vmatprep.subr.mxu0 0.0
    %1661 = vmatpush2.msra.mxu0 0.0
    %1662 = vmatprep.subr.mxu0 0.0
    %1663 = vmatpush2.msra.mxu0 0.0
    %1664 = vmatprep.mubr.f32.mxu0 0.0
    %1665 = vmatmul.mubr.f32.gmra.mxu0 %v1598
    %v1666 = vpop.f32.mrf.mxu0
    %v1667 = vadd.f32 %v235, %v1666
    %v1668 = vpop.f32.mrf.mxu0
    %1669 = vdwg.mxu0
    %v1670 = vxor.u32 %v1667, 2147483648
    %v1671 = vmul.f32 %v1670, 1.442695
    %v1672 = vpow.pop %v1671
    %v1673 = vadd.f32 %v1672, 1.0
    %v1674 = vrcp.pop %v1673
    %v1675 = vmul.f32 1.0, %v1674
    %v1676 = vmul.f32 %v1675, 2.0
    %v1677 = vsub.f32 %v1676, 1.0
    %v1678 = vmul.f32 %v1675, %v1484
    %1680 = vrot.lane.b32.xlu0 %v1677, 64
    %v1681 = vpop.permute.xlu0 %1680
    %v1683 = vmul.f32 %v1675, %v1681
    %1685 = vrot.lane.b32.xlu0 %v1683, 32
    %v1686 = vpop.permute.xlu0 %1685
    %v1688 = vadd.f32 %v1678, %v1686
    %v1689 = vtanh.pop %v1688
    %1691 = vrot.lane.b32.xlu0 %v1689, 64
    %v1692 = vpop.permute.xlu0 %1691
    %v1694 = vmul.f32 %v1675, %v1692
    %1697 = vrot.lane.b32.xlu0 %v1594, 64
    %v1698 = vpop.permute.xlu0 %1697
    %v1700 = vsel %vm257, %v1597, %v1698
    %v1702 = vsel %vm472, %v1700, 0
    %1704 = vmatprep.subr.mxu0 0.0
    %1705 = vmatpush1.msra.mxu0 0.0
    %1706 = vmatprep.subr.mxu0 0.0
    %1707 = vmatpush1.msra.mxu0 0.0
    %1708 = vmatprep.subr.mxu0 0.0
    %1709 = vmatpush1.msra.mxu0 0.0
    %1710 = vmatprep.subr.mxu0 0.0
    %1711 = vmatpush1.msra.mxu0 0.0
    %1712 = vmatprep.subr.mxu0 0.0
    %1713 = vmatpush1.msra.mxu0 0.0
    %1714 = vmatprep.subr.mxu0 0.0
    %1715 = vmatpush1.msra.mxu0 0.0
    %1716 = vmatprep.subr.mxu0 0.0
    %1717 = vmatpush1.msra.mxu0 0.0
    %1718 = vmatprep.subr.mxu0 0.0
    %1719 = vmatpush1.msra.mxu0 0.0
    %1720 = vmatprep.subr.mxu0 0.0
    %1721 = vmatpush1.msra.mxu0 %v249
    %1722 = vmatprep.subr.mxu0 0.0
    %1723 = vmatpush1.msra.mxu0 %v248
    %1724 = vmatprep.subr.mxu0 0.0
    %1725 = vmatpush1.msra.mxu0 %v247
    %1726 = vmatprep.subr.mxu0 0.0
    %1727 = vmatpush1.msra.mxu0 %v246
    %1728 = vmatprep.subr.mxu0 0.0
    %1729 = vmatpush1.msra.mxu0 %v245
    %1730 = vmatprep.subr.mxu0 0.0
    %1731 = vmatpush1.msra.mxu0 %v244
    %1732 = vmatprep.subr.mxu0 0.0
    %1733 = vmatpush1.msra.mxu0 %v243
    %1734 = vmatprep.subr.mxu0 0.0
    %1735 = vmatpush1.msra.mxu0 %v242
    %1736 = vmatprep.subr.mxu0 0.0
    %1737 = vmatpush2.msra.mxu0 0.0
    %1738 = vmatprep.subr.mxu0 0.0
    %1739 = vmatpush2.msra.mxu0 0.0
    %1740 = vmatprep.subr.mxu0 0.0
    %1741 = vmatpush2.msra.mxu0 0.0
    %1742 = vmatprep.subr.mxu0 0.0
    %1743 = vmatpush2.msra.mxu0 0.0
    %1744 = vmatprep.subr.mxu0 0.0
    %1745 = vmatpush2.msra.mxu0 0.0
    %1746 = vmatprep.subr.mxu0 0.0
    %1747 = vmatpush2.msra.mxu0 0.0
    %1748 = vmatprep.subr.mxu0 0.0
    %1749 = vmatpush2.msra.mxu0 0.0
    %1750 = vmatprep.subr.mxu0 0.0
    %1751 = vmatpush2.msra.mxu0 0.0
    %1752 = vmatprep.subr.mxu0 0.0
    %1753 = vmatpush2.msra.mxu0 0.0
    %1754 = vmatprep.subr.mxu0 0.0
    %1755 = vmatpush2.msra.mxu0 0.0
    %1756 = vmatprep.subr.mxu0 0.0
    %1757 = vmatpush2.msra.mxu0 0.0
    %1758 = vmatprep.subr.mxu0 0.0
    %1759 = vmatpush2.msra.mxu0 0.0
    %1760 = vmatprep.subr.mxu0 0.0
    %1761 = vmatpush2.msra.mxu0 0.0
    %1762 = vmatprep.subr.mxu0 0.0
    %1763 = vmatpush2.msra.mxu0 0.0
    %1764 = vmatprep.subr.mxu0 0.0
    %1765 = vmatpush2.msra.mxu0 0.0
    %1766 = vmatprep.subr.mxu0 0.0
    %1767 = vmatpush2.msra.mxu0 0.0
    %1768 = vmatprep.mubr.f32.mxu0 0.0
    %1769 = vmatmul.mubr.f32.gmra.mxu0 %v1702
    %v1770 = vpop.f32.mrf.mxu0
    %v1771 = vadd.f32 %v470, %v1770
    %v1772 = vpop.f32.mrf.mxu0
    %1773 = vdwg.mxu0
    %v1774 = vxor.u32 %v1771, 2147483648
    %v1775 = vmul.f32 %v1774, 1.442695
    %v1776 = vpow.pop %v1775
    %v1777 = vadd.f32 %v1776, 1.0
    %v1778 = vrcp.pop %v1777
    %v1779 = vmul.f32 1.0, %v1778
    %v1780 = vmul.f32 %v1779, 2.0
    %v1781 = vsub.f32 %v1780, 1.0
    %v1782 = vmul.f32 %v1779, %v1588
    %1784 = vrot.lane.b32.xlu0 %v1781, 64
    %v1785 = vpop.permute.xlu0 %1784
    %v1787 = vmul.f32 %v1779, %v1785
    %1789 = vrot.lane.b32.xlu0 %v1787, 32
    %v1790 = vpop.permute.xlu0 %1789
    %v1792 = vadd.f32 %v1782, %v1790
    %v1793 = vtanh.pop %v1792
    %1795 = vrot.lane.b32.xlu0 %v1793, 64
    %v1796 = vpop.permute.xlu0 %1795
    %v1798 = vmul.f32 %v1779, %v1796
    %1800 = vrot.lane.b32.xlu0 %v1694, 32
    %v1801 = vpop.permute.xlu0 %1800
    %1804 = vrot.lane.b32.xlu0 %v1798, 64
    %v1805 = vpop.permute.xlu0 %1804
    %v1807 = vsel %vm257, %v1801, %v1805
    %v1809 = vsel %vm472, %v1807, 0
    %1811 = vmatprep.subr.mxu0 0.0
    %1812 = vmatpush1.msra.mxu0 0.0
    %1813 = vmatprep.subr.mxu0 0.0
    %1814 = vmatpush1.msra.mxu0 0.0
    %1815 = vmatprep.subr.mxu0 0.0
    %1816 = vmatpush1.msra.mxu0 0.0
    %1817 = vmatprep.subr.mxu0 0.0
    %1818 = vmatpush1.msra.mxu0 0.0
    %1819 = vmatprep.subr.mxu0 0.0
    %1820 = vmatpush1.msra.mxu0 0.0
    %1821 = vmatprep.subr.mxu0 0.0
    %1822 = vmatpush1.msra.mxu0 0.0
    %1823 = vmatprep.subr.mxu0 0.0
    %1824 = vmatpush1.msra.mxu0 0.0
    %1825 = vmatprep.subr.mxu0 0.0
    %1826 = vmatpush1.msra.mxu0 0.0
    %1827 = vmatprep.subr.mxu0 0.0
    %1828 = vmatpush1.msra.mxu0 %v249
    %1829 = vmatprep.subr.mxu0 0.0
    %1830 = vmatpush1.msra.mxu0 %v248
    %1831 = vmatprep.subr.mxu0 0.0
    %1832 = vmatpush1.msra.mxu0 %v247
    %1833 = vmatprep.subr.mxu0 0.0
    %1834 = vmatpush1.msra.mxu0 %v246
    %1835 = vmatprep.subr.mxu0 0.0
    %1836 = vmatpush1.msra.mxu0 %v245
    %1837 = vmatprep.subr.mxu0 0.0
    %1838 = vmatpush1.msra.mxu0 %v244
    %1839 = vmatprep.subr.mxu0 0.0
    %1840 = vmatpush1.msra.mxu0 %v243
    %1841 = vmatprep.subr.mxu0 0.0
    %1842 = vmatpush1.msra.mxu0 %v242
    %1843 = vmatprep.subr.mxu0 0.0
    %1844 = vmatpush2.msra.mxu0 0.0
    %1845 = vmatprep.subr.mxu0 0.0
    %1846 = vmatpush2.msra.mxu0 0.0
    %1847 = vmatprep.subr.mxu0 0.0
    %1848 = vmatpush2.msra.mxu0 0.0
    %1849 = vmatprep.subr.mxu0 0.0
    %1850 = vmatpush2.msra.mxu0 0.0
    %1851 = vmatprep.subr.mxu0 0.0
    %1852 = vmatpush2.msra.mxu0 0.0
    %1853 = vmatprep.subr.mxu0 0.0
    %1854 = vmatpush2.msra.mxu0 0.0
    %1855 = vmatprep.subr.mxu0 0.0
    %1856 = vmatpush2.msra.mxu0 0.0
    %1857 = vmatprep.subr.mxu0 0.0
    %1858 = vmatpush2.msra.mxu0 0.0
    %1859 = vmatprep.subr.mxu0 0.0
    %1860 = vmatpush2.msra.mxu0 0.0
    %1861 = vmatprep.subr.mxu0 0.0
    %1862 = vmatpush2.msra.mxu0 0.0
    %1863 = vmatprep.subr.mxu0 0.0
    %1864 = vmatpush2.msra.mxu0 0.0
    %1865 = vmatprep.subr.mxu0 0.0
    %1866 = vmatpush2.msra.mxu0 0.0
    %1867 = vmatprep.subr.mxu0 0.0
    %1868 = vmatpush2.msra.mxu0 0.0
    %1869 = vmatprep.subr.mxu0 0.0
    %1870 = vmatpush2.msra.mxu0 0.0
    %1871 = vmatprep.subr.mxu0 0.0
    %1872 = vmatpush2.msra.mxu0 0.0
    %1873 = vmatprep.subr.mxu0 0.0
    %1874 = vmatpush2.msra.mxu0 0.0
    %1875 = vmatprep.mubr.f32.mxu0 0.0
    %1876 = vmatmul.mubr.f32.gmra.mxu0 %v1809
    %v1877 = vpop.f32.mrf.mxu0
    %v1878 = vadd.f32 %v470, %v1877
    %v1879 = vpop.f32.mrf.mxu0
    %1880 = vdwg.mxu0
    %v1881 = vxor.u32 %v1878, 2147483648
    %v1882 = vmul.f32 %v1881, 1.442695
    %v1883 = vpow.pop %v1882
    %v1884 = vadd.f32 %v1883, 1.0
    %v1885 = vrcp.pop %v1884
    %v1886 = vmul.f32 1.0, %v1885
    %v1887 = vmul.f32 %v1886, 2.0
    %v1888 = vsub.f32 %v1887, 1.0
    %v1889 = vmul.f32 %v1886, %v1792
    %1891 = vrot.lane.b32.xlu0 %v1888, 64
    %v1892 = vpop.permute.xlu0 %1891
    %v1894 = vmul.f32 %v1886, %v1892
    %1896 = vrot.lane.b32.xlu0 %v1894, 32
    %v1897 = vpop.permute.xlu0 %1896
    %v1899 = vadd.f32 %v1889, %v1897
    %v1900 = vtanh.pop %v1899
    %1902 = vrot.lane.b32.xlu0 %v1900, 64
    %v1903 = vpop.permute.xlu0 %1902
    %v1905 = vmul.f32 %v1886, %v1903
    %v1906 = vld [vmem:[#allocation8] sm:$0xff]
    %v1907 = vld [vmem:[#allocation8 + $0x8] sm:$0xff]
    %v1908 = vld [vmem:[#allocation8 + $0x10] sm:$0xff]
    %v1909 = vld [vmem:[#allocation8 + $0x18] sm:$0xff]
    %v1910 = vld [vmem:[%s9] sm:$0x1]
    %v1912 = vlaneseq
    %v1913 = vshrl.u32 %v1912, 7
    %v1914 = vsub.s32 0, %v1913
    %v1915 = vrot.slane %v1910, %v1914
    %1918 = vrot.lane.b32.xlu0 %v1905, 32
    %v1919 = vpop.permute.xlu0 %1918
    %v1920 = vsel %vm257, %v1919, 0
    %1922 = vmatprep.subr.mxu0 0.0
    %1923 = vmatpush1.msra.mxu0 0.0
    %1924 = vmatprep.subr.mxu0 0.0
    %1925 = vmatpush1.msra.mxu0 0.0
    %1926 = vmatprep.subr.mxu0 0.0
    %1927 = vmatpush1.msra.mxu0 0.0
    %1928 = vmatprep.subr.mxu0 0.0
    %1929 = vmatpush1.msra.mxu0 0.0
    %1930 = vmatprep.subr.mxu0 0.0
    %1931 = vmatpush1.msra.mxu0 0.0
    %1932 = vmatprep.subr.mxu0 0.0
    %1933 = vmatpush1.msra.mxu0 0.0
    %1934 = vmatprep.subr.mxu0 0.0
    %1935 = vmatpush1.msra.mxu0 0.0
    %1936 = vmatprep.subr.mxu0 0.0
    %1937 = vmatpush1.msra.mxu0 0.0
    %1938 = vmatprep.subr.mxu0 0.0
    %1939 = vmatpush1.msra.mxu0 0.0
    %1940 = vmatprep.subr.mxu0 0.0
    %1941 = vmatpush1.msra.mxu0 0.0
    %1942 = vmatprep.subr.mxu0 0.0
    %1943 = vmatpush1.msra.mxu0 0.0
    %1944 = vmatprep.subr.mxu0 0.0
    %1945 = vmatpush1.msra.mxu0 0.0
    %1946 = vmatprep.subr.mxu0 0.0
    %1947 = vmatpush1.msra.mxu0 %v1909
    %1948 = vmatprep.subr.mxu0 0.0
    %1949 = vmatpush1.msra.mxu0 %v1908
    %1950 = vmatprep.subr.mxu0 0.0
    %1951 = vmatpush1.msra.mxu0 %v1907
    %1952 = vmatprep.subr.mxu0 0.0
    %1953 = vmatpush1.msra.mxu0 %v1906
    %1954 = vmatprep.subr.mxu0 0.0
    %1955 = vmatpush2.msra.mxu0 0.0
    %1956 = vmatprep.subr.mxu0 0.0
    %1957 = vmatpush2.msra.mxu0 0.0
    %1958 = vmatprep.subr.mxu0 0.0
    %1959 = vmatpush2.msra.mxu0 0.0
    %1960 = vmatprep.subr.mxu0 0.0
    %1961 = vmatpush2.msra.mxu0 0.0
    %1962 = vmatprep.subr.mxu0 0.0
    %1963 = vmatpush2.msra.mxu0 0.0
    %1964 = vmatprep.subr.mxu0 0.0
    %1965 = vmatpush2.msra.mxu0 0.0
    %1966 = vmatprep.subr.mxu0 0.0
    %1967 = vmatpush2.msra.mxu0 0.0
    %1968 = vmatprep.subr.mxu0 0.0
    %1969 = vmatpush2.msra.mxu0 0.0
    %1970 = vmatprep.subr.mxu0 0.0
    %1971 = vmatpush2.msra.mxu0 0.0
    %1972 = vmatprep.subr.mxu0 0.0
    %1973 = vmatpush2.msra.mxu0 0.0
    %1974 = vmatprep.subr.mxu0 0.0
    %1975 = vmatpush2.msra.mxu0 0.0
    %1976 = vmatprep.subr.mxu0 0.0
    %1977 = vmatpush2.msra.mxu0 0.0
    %1978 = vmatprep.subr.mxu0 0.0
    %1979 = vmatpush2.msra.mxu0 0.0
    %1980 = vmatprep.subr.mxu0 0.0
    %1981 = vmatpush2.msra.mxu0 0.0
    %1982 = vmatprep.subr.mxu0 0.0
    %1983 = vmatpush2.msra.mxu0 0.0
    %1984 = vmatprep.subr.mxu0 0.0
    %1985 = vmatpush2.msra.mxu0 0.0
    %1986 = vmatprep.mubr.f32.mxu0 0.0
    %1987 = vmatmul.mubr.f32.gmra.mxu0 %v1920
    %v1988 = vpop.f32.mrf.mxu0
    %v1989 = vadd.f32 %v1915, %v1988
    %v1990 = vpop.f32.mrf.mxu0
    %1991 = vdwg.mxu0
    %1992 = vst [vmem:[#allocation10] sm:$0xff] %v1989
    // Predicated region
    $region58: #{tpu_custom_call.1} parent=1 // pred_check
      _
    $region59: #{tpu_custom_call.1} parent=1 // pred_check_branch
      %1994 = sbr.rel (0) target = $region61
    $region60: #{tpu_custom_call.1} parent=1 // pred_region
      %s1996 = ssub.s32 128, 128
      %1997 = vsyncadd [#allocation4], %s1996
      %s1999 = sshll.u32 [#allocation10], 4
      %s2000 = int_to_ptr.vmem [resolvable:$true] %s1999
      %2002 = dma.vmem_to_hbm [thread:$0]  %s2000, 128, %s10, [#allocation4]
    $region61: #{tpu_custom_call.1} parent=1 // pred_fallthru
      _
    // Predicated region
    $region62: #{tpu_custom_call.1} parent=1 // pred_check
      _
    $region63: #{tpu_custom_call.1} parent=1 // pred_check_branch
      %2004 = sbr.rel (0) target = $region65
    $region64: #{tpu_custom_call.1} parent=1 // pred_region
      %2005 = dma.done [#allocation4], 128
    $region65: #{tpu_custom_call.1} parent=1 // pred_fallthru
      _
    %2006 = vsyncpa [#allocation3], 1
    %2007 = vsyncpa [#allocation6], 1
    %2008 = vsyncpa [#allocation9], 1
    %2009 = vsyncpa [#allocation4], 1

</llo_original>
